<compile_context>
chip_gen: v7x
topology: tpu7x:2x2x1
jax: 0.10.0
libtpu: 0.0.40
codegen_flags: <defaults>
</compile_context>

<pallas_src>
import functools

import jax
import jax.numpy as jnp
from jax.experimental import pallas as pl
from jax.experimental.pallas import tpu as pltpu


def _vae_kernel(x_ref, w1_ref, b1_ref, wms_ref, bms_ref,
                w3_ref, b3_ref, w4_ref, b4_ref, eps_ref,
                xr_ref, ms_ref):
    bf16 = jnp.bfloat16
    z_dim = eps_ref.shape[-1]

    # encode: h = relu(x @ W1 + b1)       (bf16 MXU matmul, f32 accumulate)
    h = jnp.dot(x_ref[...].astype(bf16), w1_ref[...],
                preferred_element_type=jnp.float32) + b1_ref[...]
    h = jnp.maximum(h, 0.0)

    # fused mu/sigma head: one (H, 2Z) matmul, lane-dense packed output
    ms = jnp.dot(h.astype(bf16), wms_ref[...],
                 preferred_element_type=jnp.float32) + bms_ref[...]
    mu = ms[:, :z_dim]
    sigma = ms[:, z_dim:]

    # reparameterization: z = mu + sigma * eps
    z = mu + sigma * eps_ref[...]

    # decode: h2 = relu(z @ W3 + b3); x_recon = sigmoid(h2 @ W4 + b4)
    h2 = jnp.dot(z.astype(bf16), w3_ref[...],
                 preferred_element_type=jnp.float32) + b3_ref[...]
    h2 = jnp.maximum(h2, 0.0)
    logits = jnp.dot(h2.astype(bf16), w4_ref[...],
                     preferred_element_type=jnp.float32) + b4_ref[...]

    xr_ref[...] = jax.nn.sigmoid(logits)
    ms_ref[...] = ms


@functools.partial(jax.jit, static_argnames=("tile_b",))
def vae_forward(x, params, eps, *, tile_b=128):
    """Fused VAE forward. x: (B, D) f32, eps: (B, Z) f32 -> (x_recon, mu, sigma)."""
    B, D = x.shape
    Z = eps.shape[1]
    H = params["w1"].shape[1]

    # batch tile: multiple of 8 sublanes, capped at tile_b
    tb = min(tile_b, max(8, ((B + 7) // 8) * 8))
    n_tiles = pl.cdiv(B, tb)
    B_pad = n_tiles * tb
    if B_pad != B:
        x = jnp.pad(x, ((0, B_pad - B), (0, 0)))
        eps = jnp.pad(eps, ((0, B_pad - B), (0, 0)))

    def batch_spec(cols):
        return pl.BlockSpec((tb, cols), lambda i: (i, 0))

    def resident(arr):
        # full-array block, constant index map -> loaded once, VMEM-resident
        return pl.BlockSpec(arr.shape, lambda i: (0, 0))

    in_specs = [
        batch_spec(D),
        resident(params["w1"]), resident(params["b1"]),
        resident(params["w_ms"]), resident(params["b_ms"]),
        resident(params["w3"]), resident(params["b3"]),
        resident(params["w4"]), resident(params["b4"]),
        batch_spec(Z),
    ]
    out_specs = (batch_spec(D), batch_spec(2 * Z))
    out_shapes = (
        jax.ShapeDtypeStruct((B_pad, D), jnp.float32),       # x_reconstructed
        jax.ShapeDtypeStruct((B_pad, 2 * Z), jnp.float32),   # packed [mu | sigma]
    )

    flops = 2 * B_pad * (D * H + H * 2 * Z + Z * H + H * D)
    bytes_accessed = int(
        x.nbytes + eps.nbytes
        + sum(int(v.nbytes) for v in params.values())
        + B_pad * D * 4 + B_pad * 2 * Z * 4
    )
    cost = pl.CostEstimate(flops=flops, transcendentals=B_pad * D,
                           bytes_accessed=bytes_accessed)

    xr_pad, ms_pad = pl.pallas_call(
        _vae_kernel,
        out_shape=out_shapes,
        grid=(n_tiles,),
        in_specs=in_specs,
        out_specs=out_specs,
        compiler_params=pltpu.CompilerParams(
            dimension_semantics=("parallel",)),
        cost_estimate=cost,
    )(
        x,
        params["w1"], params["b1"],
        params["w_ms"], params["b_ms"],
        params["w3"], params["b3"],
        params["w4"], params["b4"],
        eps,
    )

    x_recon = xr_pad[:B]
    mu = ms_pad[:B, :Z]
    sigma = ms_pad[:B, Z:]
    return x_recon, mu, sigma


def init_params(key, input_dim, h_dim, z_dim):
    """nn.Linear-style U(-1/sqrt(fan_in), +1/sqrt(fan_in)) init.

    Weights are stored (in, out) in bf16 (MXU-friendly); biases (1, out) f32.
    The mu and sigma heads are fused at init time into a single (H, 2Z) weight.
    """
    def linear(k, fan_in, fan_out):
        kw, kb = jax.random.split(k)
        bound = 1.0 / jnp.sqrt(jnp.float32(fan_in))
        w = jax.random.uniform(kw, (fan_in, fan_out), jnp.float32, -bound, bound)
        b = jax.random.uniform(kb, (1, fan_out), jnp.float32, -bound, bound)
        return w, b

    k1, k2, k3, k4, k5 = jax.random.split(key, 5)
    w1, b1 = linear(k1, input_dim, h_dim)        # img_2hid
    wmu, bmu = linear(k2, h_dim, z_dim)          # hid_2mu
    wsg, bsg = linear(k3, h_dim, z_dim)          # hid_2sigma
    w3, b3 = linear(k4, z_dim, h_dim)            # z_2hid
    w4, b4 = linear(k5, h_dim, input_dim)        # hid_2img

    w_ms = jnp.concatenate([wmu, wsg], axis=1)   # fused (H, 2Z) head
    b_ms = jnp.concatenate([bmu, bsg], axis=1)

    bf16 = jnp.bfloat16
    return dict(
        w1=w1.astype(bf16), b1=b1,
        w_ms=w_ms.astype(bf16), b_ms=b_ms,
        w3=w3.astype(bf16), b3=b3,
        w4=w4.astype(bf16), b4=b4,
    )


def vae_reference(x, params, eps):
    """Pure-JAX reference (same bf16-weight / f32-accumulate numerics)."""
    bf16 = jnp.bfloat16
    f32 = jnp.float32
    Z = eps.shape[-1]
    h = jnp.maximum(jnp.dot(x.astype(bf16), params["w1"],
                            preferred_element_type=f32) + params["b1"], 0.0)
    ms = jnp.dot(h.astype(bf16), params["w_ms"],
                 preferred_element_type=f32) + params["b_ms"]
    mu, sigma = ms[:, :Z], ms[:, Z:]
    z = mu + sigma * eps
    h2 = jnp.maximum(jnp.dot(z.astype(bf16), params["w3"],
                             preferred_element_type=f32) + params["b3"], 0.0)
    xr = jax.nn.sigmoid(jnp.dot(h2.astype(bf16), params["w4"],
                                preferred_element_type=f32) + params["b4"])
    return xr, mu, sigma


if __name__ == "__main__":
    # Small, TPU-friendly shapes consistent with the MLP VAE forward.
    # B is deliberately not a multiple of the 128-row batch tile to exercise
    # the padding + multi-step grid path (3 grid steps).
    B, INPUT_DIM, H_DIM, Z_DIM = 300, 256, 256, 64

    key = jax.random.PRNGKey(0)
    k_params, k_x, k_eps = jax.random.split(key, 3)

    params = init_params(k_params, INPUT_DIM, H_DIM, Z_DIM)
    x = jax.random.uniform(k_x, (B, INPUT_DIM), jnp.float32)    # image-like [0,1)
    eps = jax.random.normal(k_eps, (B, Z_DIM), jnp.float32)     # randn_like(sigma)

    x_rec, mu, sigma = jax.block_until_ready(vae_forward(x, params, eps))

    # correctness check against pure-JAX reference
    xr_ref, mu_ref, sg_ref = vae_reference(x, params, eps)
    assert x_rec.shape == (B, INPUT_DIM)
    assert mu.shape == (B, Z_DIM) and sigma.shape == (B, Z_DIM)
    assert jnp.allclose(x_rec, xr_ref, atol=1e-3, rtol=1e-3)
    assert jnp.allclose(mu, mu_ref, atol=1e-3, rtol=1e-3)
    assert jnp.allclose(sigma, sg_ref, atol=1e-3, rtol=1e-3)

    print("KERNEL_OK")
</pallas_src>

<mosaic_0001>
module attributes {stable_mosaic.version = 11 : i64} {
  func.func @_vae_kernel(%arg0: i32, %arg1: memref<128x256xf32, #tpu.memory_space<vmem>>, %arg2: memref<256x256xbf16, #tpu.memory_space<vmem>>, %arg3: memref<1x256xf32, #tpu.memory_space<vmem>>, %arg4: memref<256x128xbf16, #tpu.memory_space<vmem>>, %arg5: memref<1x128xf32, #tpu.memory_space<vmem>>, %arg6: memref<64x256xbf16, #tpu.memory_space<vmem>>, %arg7: memref<1x256xf32, #tpu.memory_space<vmem>>, %arg8: memref<256x256xbf16, #tpu.memory_space<vmem>>, %arg9: memref<1x256xf32, #tpu.memory_space<vmem>>, %arg10: memref<128x64xf32, #tpu.memory_space<vmem>>, %arg11: memref<128x256xf32, #tpu.memory_space<vmem>>, %arg12: memref<128x128xf32, #tpu.memory_space<vmem>>) attributes {dimension_semantics = [#tpu.dimension_semantics<parallel>], iteration_bounds = array<i64: 3>, scalar_prefetch = 0 : i64, scratch_operands = 0 : i64, tpu.core_type = #tpu.core_type<tc>, window_params = [{transform_indices = @transform_0, window_bounds = array<i64: 128, 256>}, {pipeline_mode = #tpu.pipeline_mode<synchronous>, transform_indices = @transform_1, window_bounds = array<i64: 256, 256>}, {pipeline_mode = #tpu.pipeline_mode<synchronous>, transform_indices = @transform_2, window_bounds = array<i64: 1, 256>}, {pipeline_mode = #tpu.pipeline_mode<synchronous>, transform_indices = @transform_3, window_bounds = array<i64: 256, 128>}, {pipeline_mode = #tpu.pipeline_mode<synchronous>, transform_indices = @transform_4, window_bounds = array<i64: 1, 128>}, {pipeline_mode = #tpu.pipeline_mode<synchronous>, transform_indices = @transform_5, window_bounds = array<i64: 64, 256>}, {pipeline_mode = #tpu.pipeline_mode<synchronous>, transform_indices = @transform_6, window_bounds = array<i64: 1, 256>}, {pipeline_mode = #tpu.pipeline_mode<synchronous>, transform_indices = @transform_7, window_bounds = array<i64: 256, 256>}, {pipeline_mode = #tpu.pipeline_mode<synchronous>, transform_indices = @transform_8, window_bounds = array<i64: 1, 256>}, {transform_indices = @transform_9, window_bounds = array<i64: 128, 64>}, {transform_indices = @transform_10, window_bounds = array<i64: 128, 256>}, {transform_indices = @transform_11, window_bounds = array<i64: 128, 128>}]} {
    %c0 = arith.constant 0 : index
    %c0_0 = arith.constant 0 : index
    %0 = vector.load %arg1[%c0, %c0_0] : memref<128x256xf32, #tpu.memory_space<vmem>>, vector<128x256xf32>
    %1 = arith.truncf %0 : vector<128x256xf32> to vector<128x256xbf16>
    %c0_1 = arith.constant 0 : index
    %c0_2 = arith.constant 0 : index
    %2 = vector.load %arg2[%c0_1, %c0_2] : memref<256x256xbf16, #tpu.memory_space<vmem>>, vector<256x256xbf16>
    %cst = arith.constant dense<0.000000e+00> : vector<128x256xf32>
    %3 = tpu.matmul %1, %2, %cst {dimension_numbers = #tpu.dot_dimension_numbers<[1], [0], [0], [1], [0, 0, 1, 1], [], []>} : vector<128x256xbf16>, vector<256x256xbf16>, vector<128x256xf32> -> vector<128x256xf32>
    %c0_3 = arith.constant 0 : index
    %c0_4 = arith.constant 0 : index
    %4 = vector.load %arg3[%c0_3, %c0_4] : memref<1x256xf32, #tpu.memory_space<vmem>>, vector<1x256xf32>
    %5 = vector.broadcast %4 : vector<1x256xf32> to vector<128x256xf32>
    %6 = arith.addf %3, %5 : vector<128x256xf32>
    %cst_5 = arith.constant 0.000000e+00 : f32
    %7 = vector.broadcast %cst_5 : f32 to vector<128x256xf32>
    %8 = arith.maximumf %6, %7 : vector<128x256xf32>
    %9 = arith.truncf %8 : vector<128x256xf32> to vector<128x256xbf16>
    %c0_6 = arith.constant 0 : index
    %c0_7 = arith.constant 0 : index
    %10 = vector.load %arg4[%c0_6, %c0_7] : memref<256x128xbf16, #tpu.memory_space<vmem>>, vector<256x128xbf16>
    %cst_8 = arith.constant dense<0.000000e+00> : vector<128x128xf32>
    %11 = tpu.matmul %9, %10, %cst_8 {dimension_numbers = #tpu.dot_dimension_numbers<[1], [0], [0], [1], [0, 0, 1, 1], [], []>} : vector<128x256xbf16>, vector<256x128xbf16>, vector<128x128xf32> -> vector<128x128xf32>
    %c0_9 = arith.constant 0 : index
    %c0_10 = arith.constant 0 : index
    %12 = vector.load %arg5[%c0_9, %c0_10] : memref<1x128xf32, #tpu.memory_space<vmem>>, vector<1x128xf32>
    %13 = vector.broadcast %12 : vector<1x128xf32> to vector<128x128xf32>
    %14 = arith.addf %11, %13 : vector<128x128xf32>
    %15 = vector.extract_strided_slice %14 {offsets = [0, 0], sizes = [128, 64], strides = [1, 1]} : vector<128x128xf32> to vector<128x64xf32>
    %16 = vector.extract_strided_slice %14 {offsets = [0, 64], sizes = [128, 64], strides = [1, 1]} : vector<128x128xf32> to vector<128x64xf32>
    %c0_11 = arith.constant 0 : index
    %c0_12 = arith.constant 0 : index
    %17 = vector.load %arg10[%c0_11, %c0_12] : memref<128x64xf32, #tpu.memory_space<vmem>>, vector<128x64xf32>
    %18 = arith.mulf %16, %17 : vector<128x64xf32>
    %19 = arith.addf %15, %18 : vector<128x64xf32>
    %20 = arith.truncf %19 : vector<128x64xf32> to vector<128x64xbf16>
    %c0_13 = arith.constant 0 : index
    %c0_14 = arith.constant 0 : index
    %21 = vector.load %arg6[%c0_13, %c0_14] : memref<64x256xbf16, #tpu.memory_space<vmem>>, vector<64x256xbf16>
    %cst_15 = arith.constant dense<0.000000e+00> : vector<128x256xf32>
    %22 = tpu.matmul %20, %21, %cst_15 {dimension_numbers = #tpu.dot_dimension_numbers<[1], [0], [0], [1], [0, 0, 1, 1], [], []>} : vector<128x64xbf16>, vector<64x256xbf16>, vector<128x256xf32> -> vector<128x256xf32>
    %c0_16 = arith.constant 0 : index
    %c0_17 = arith.constant 0 : index
    %23 = vector.load %arg7[%c0_16, %c0_17] : memref<1x256xf32, #tpu.memory_space<vmem>>, vector<1x256xf32>
    %24 = vector.broadcast %23 : vector<1x256xf32> to vector<128x256xf32>
    %25 = arith.addf %22, %24 : vector<128x256xf32>
    %cst_18 = arith.constant 0.000000e+00 : f32
    %26 = vector.broadcast %cst_18 : f32 to vector<128x256xf32>
    %27 = arith.maximumf %25, %26 : vector<128x256xf32>
    %28 = arith.truncf %27 : vector<128x256xf32> to vector<128x256xbf16>
    %c0_19 = arith.constant 0 : index
    %c0_20 = arith.constant 0 : index
    %29 = vector.load %arg8[%c0_19, %c0_20] : memref<256x256xbf16, #tpu.memory_space<vmem>>, vector<256x256xbf16>
    %cst_21 = arith.constant dense<0.000000e+00> : vector<128x256xf32>
    %30 = tpu.matmul %28, %29, %cst_21 {dimension_numbers = #tpu.dot_dimension_numbers<[1], [0], [0], [1], [0, 0, 1, 1], [], []>} : vector<128x256xbf16>, vector<256x256xbf16>, vector<128x256xf32> -> vector<128x256xf32>
    %c0_22 = arith.constant 0 : index
    %c0_23 = arith.constant 0 : index
    %31 = vector.load %arg9[%c0_22, %c0_23] : memref<1x256xf32, #tpu.memory_space<vmem>>, vector<1x256xf32>
    %32 = vector.broadcast %31 : vector<1x256xf32> to vector<128x256xf32>
    %33 = arith.addf %30, %32 : vector<128x256xf32>
    %34 = arith.negf %33 : vector<128x256xf32>
    %35 = math.exp %34 : vector<128x256xf32>
    %cst_24 = arith.constant 1.000000e+00 : f32
    %36 = vector.broadcast %cst_24 : f32 to vector<128x256xf32>
    %37 = arith.addf %36, %35 : vector<128x256xf32>
    %38 = arith.divf %36, %37 : vector<128x256xf32>
    %c0_25 = arith.constant 0 : index
    %c0_26 = arith.constant 0 : index
    %39 = vector.load %arg11[%c0_25, %c0_26] : memref<128x256xf32, #tpu.memory_space<vmem>>, vector<128x256xf32>
    tpu.vector_store %arg11[%c0_25, %c0_26], %38 {strides = array<i32>} : memref<128x256xf32, #tpu.memory_space<vmem>>, vector<128x256xf32>,
    %c0_27 = arith.constant 0 : index
    %c0_28 = arith.constant 0 : index
    %40 = vector.load %arg12[%c0_27, %c0_28] : memref<128x128xf32, #tpu.memory_space<vmem>>, vector<128x128xf32>
    tpu.vector_store %arg12[%c0_27, %c0_28], %14 {strides = array<i32>} : memref<128x128xf32, #tpu.memory_space<vmem>>, vector<128x128xf32>,
    return
  }
  func.func @transform_0(%arg0: i32) -> (i32, i32) {
    %c0_i32 = arith.constant 0 : i32
    %c0_i32_0 = arith.constant 0 : i32
    return %arg0, %c0_i32 : i32, i32
  }
  func.func @transform_1(%arg0: i32) -> (i32, i32) {
    %c0_i32 = arith.constant 0 : i32
    %c0_i32_0 = arith.constant 0 : i32
    %c0_i32_1 = arith.constant 0 : i32
    return %c0_i32, %c0_i32_0 : i32, i32
  }
  func.func @transform_2(%arg0: i32) -> (i32, i32) {
    %c0_i32 = arith.constant 0 : i32
    %c0_i32_0 = arith.constant 0 : i32
    %c0_i32_1 = arith.constant 0 : i32
    return %c0_i32, %c0_i32_0 : i32, i32
  }
  func.func @transform_3(%arg0: i32) -> (i32, i32) {
    %c0_i32 = arith.constant 0 : i32
    %c0_i32_0 = arith.constant 0 : i32
    %c0_i32_1 = arith.constant 0 : i32
    return %c0_i32, %c0_i32_0 : i32, i32
  }
  func.func @transform_4(%arg0: i32) -> (i32, i32) {
    %c0_i32 = arith.constant 0 : i32
    %c0_i32_0 = arith.constant 0 : i32
    %c0_i32_1 = arith.constant 0 : i32
    return %c0_i32, %c0_i32_0 : i32, i32
  }
  func.func @transform_5(%arg0: i32) -> (i32, i32) {
    %c0_i32 = arith.constant 0 : i32
    %c0_i32_0 = arith.constant 0 : i32
    %c0_i32_1 = arith.constant 0 : i32
    return %c0_i32, %c0_i32_0 : i32, i32
  }
  func.func @transform_6(%arg0: i32) -> (i32, i32) {
    %c0_i32 = arith.constant 0 : i32
    %c0_i32_0 = arith.constant 0 : i32
    %c0_i32_1 = arith.constant 0 : i32
    return %c0_i32, %c0_i32_0 : i32, i32
  }
  func.func @transform_7(%arg0: i32) -> (i32, i32) {
    %c0_i32 = arith.constant 0 : i32
    %c0_i32_0 = arith.constant 0 : i32
    %c0_i32_1 = arith.constant 0 : i32
    return %c0_i32, %c0_i32_0 : i32, i32
  }
  func.func @transform_8(%arg0: i32) -> (i32, i32) {
    %c0_i32 = arith.constant 0 : i32
    %c0_i32_0 = arith.constant 0 : i32
    %c0_i32_1 = arith.constant 0 : i32
    return %c0_i32, %c0_i32_0 : i32, i32
  }
  func.func @transform_9(%arg0: i32) -> (i32, i32) {
    %c0_i32 = arith.constant 0 : i32
    %c0_i32_0 = arith.constant 0 : i32
    return %arg0, %c0_i32 : i32, i32
  }
  func.func @transform_10(%arg0: i32) -> (i32, i32) {
    %c0_i32 = arith.constant 0 : i32
    %c0_i32_0 = arith.constant 0 : i32
    return %arg0, %c0_i32 : i32, i32
  }
  func.func @transform_11(%arg0: i32) -> (i32, i32) {
    %c0_i32 = arith.constant 0 : i32
    %c0_i32_0 = arith.constant 0 : i32
    return %arg0, %c0_i32 : i32, i32
  }
}

</mosaic_0001>

<llo_original>
// kernel: vae_forward.1
$region0: #{vae_forward.1}
  #allocation0 [shape = 'u32[]', space=smem, size = 0x4, offset = 0x4, fixed_abs, tag = 'smem constant byte address 0x4 - core index']
  #allocation1 [shape = 'u32[144,128]{1,0:T(1,128)}', space=vmem, size = 0x12000, scoped, tag = 'internal scratch']
  %s0 = inlined_call_operand.vmem [shape: f32[384,256], index: 0, kind: input, shape index: {}]
  %s1 = inlined_call_operand.vmem [shape: bf16[256,256], index: 1, kind: input, shape index: {}]
  %s2 = inlined_call_operand.vmem [shape: f32[1,256], index: 2, kind: input, shape index: {}]
  %s3 = inlined_call_operand.vmem [shape: bf16[256,128], index: 3, kind: input, shape index: {}]
  %s4 = inlined_call_operand.vmem [shape: f32[1,128], index: 4, kind: input, shape index: {}]
  %s5 = inlined_call_operand.vmem [shape: bf16[64,256], index: 5, kind: input, shape index: {}]
  %s6 = inlined_call_operand.vmem [shape: f32[1,256], index: 6, kind: input, shape index: {}]
  %s7 = inlined_call_operand.vmem [shape: bf16[256,256], index: 7, kind: input, shape index: {}]
  %s8 = inlined_call_operand.vmem [shape: f32[1,256], index: 8, kind: input, shape index: {}]
  %s9 = inlined_call_operand.vmem [shape: f32[384,64], index: 9, kind: input, shape index: {}]
  %s10 = inlined_call_operand.vmem [shape: f32[384,256], index: 10, kind: output, shape index: {0}]
  %s11 = inlined_call_operand.vmem [shape: f32[384,128], index: 11, kind: output, shape index: {1}]
  %12 = xla_tuple %s10, %s11
  %s13 = sld [smem:[#allocation0]]
  $region81: #{vae_forward.1} parent=0
    _
  %s15 = ssub.s32 1, %s13
  %s16 = scalar_select 0, %s15, %s13
  loop: start=0, step=1, limit=5
  $region2: #{vae_forward.1} parent=0 // loop_pre_header
    _
  $region3: #{vae_forward.1} parent=0 // loop_header
    %s18 = sphi 0, %s22
    %p19 = scmp.ge.s32.totalorder %s18, 5
    %s28 = sphi 0, %s30
    %s31 = sphi 0, %s28
    %s32 = sphi 0, %s31
    %s48 = sphi 0, %s32
    %s52 = sphi 0, %s52
    %s54 = sphi 0, %s52
    %s55 = sphi 0, %s54
    %s69 = sphi 0, %s55
    %s73 = sphi 0, %s73
    %s75 = sphi 0, %s73
    %s76 = sphi 0, %s75
    %s90 = sphi 0, %s76
    %s94 = sphi 0, %s94
    %s96 = sphi 0, %s94
    %s97 = sphi 0, %s96
    %s111 = sphi 0, %s97
    %s115 = sphi 0, %s115
    %s117 = sphi 0, %s115
    %s118 = sphi 0, %s117
    %s132 = sphi 0, %s118
    %s136 = sphi 0, %s136
    %s138 = sphi 0, %s136
    %s139 = sphi 0, %s138
    %s153 = sphi 0, %s139
    %s157 = sphi 0, %s157
    %s159 = sphi 0, %s157
    %s160 = sphi 0, %s159
    %s174 = sphi 0, %s160
    %s178 = sphi 0, %s178
    %s180 = sphi 0, %s178
    %s181 = sphi 0, %s180
    %s195 = sphi 0, %s181
    %s199 = sphi 0, %s199
    %s201 = sphi 0, %s199
    %s202 = sphi 0, %s201
    %s216 = sphi 0, %s202
    %s222 = sphi 0, %s224
    %s225 = sphi 0, %s222
    %s226 = sphi 0, %s225
    %s242 = sphi 0, %s226
    %s248 = sphi 0, %s250
    %s251 = sphi 0, %s248
    %s252 = sphi 0, %s251
    %s268 = sphi 0, %s252
    %s274 = sphi 0, %s276
    %s277 = sphi 0, %s274
    %s278 = sphi 0, %s277
    %s294 = sphi 0, %s278
  $region4: #{vae_forward.1} parent=0 // loop_header_branch
    %21 = sbr.rel (%p19) target = $region8
  $region5: #{vae_forward.1} parent=0 // loop_body
    %s23 = ssub.s32 %s18, 1
    %s24 = ssub.s32 %s18, 2
    %s25 = sadd.s32 %s18, 1
    %s26 = ssub.s32 %s18, %s25
    %p27 = scmp.eq.s32.totalorder %s26, 0
    %s29 = sadd.s32 %s28, 1
    %s30 = scalar_select %p27, %s28, %s29
    %p33 = pneg %p27
    %p34 = scmp.eq.s32.totalorder %s18, 2
    %p35 = por %p33, %p34
    %p36 = scmp.ne.s32.totalorder %s28, %s31
    %p37 = scmp.eq.s32.totalorder %s18, 0
    %p38 = por %p36, %p37
    %p39 = scmp.ne.s32.totalorder %s28, %s31
    %p40 = scmp.eq.s32.totalorder %s23, 2
    %p41 = por %p39, %p40
    %p42 = scmp.ne.s32.totalorder %s31, %s32
    %p43 = scmp.eq.s32.totalorder %s23, 0
    %p44 = por %p42, %p43
    %p45 = scmp.ne.s32.totalorder %s31, %s32
    %p46 = scmp.eq.s32.totalorder %s24, 2
    %p47 = por %p45, %p46
    %p49 = scmp.ne.s32.totalorder %s32, %s48
    %p50 = scmp.eq.s32.totalorder %s24, 0
    %p51 = por %p49, %p50
    %s53 = sadd.s32 %s52, 1
    %p56 = scmp.eq.s32.totalorder %s18, 2
    %p57 = scmp.ne.s32.totalorder %s52, %s54
    %p58 = scmp.eq.s32.totalorder %s18, 0
    %p59 = por %p57, %p58
    %p60 = scmp.ne.s32.totalorder %s52, %s54
    %p61 = scmp.eq.s32.totalorder %s23, 2
    %p62 = por %p60, %p61
    %p63 = scmp.ne.s32.totalorder %s54, %s55
    %p64 = scmp.eq.s32.totalorder %s23, 0
    %p65 = por %p63, %p64
    %p66 = scmp.ne.s32.totalorder %s54, %s55
    %p67 = scmp.eq.s32.totalorder %s24, 2
    %p68 = por %p66, %p67
    %p70 = scmp.ne.s32.totalorder %s55, %s69
    %p71 = scmp.eq.s32.totalorder %s24, 0
    %p72 = por %p70, %p71
    %s74 = sadd.s32 %s73, 1
    %p77 = scmp.eq.s32.totalorder %s18, 2
    %p78 = scmp.ne.s32.totalorder %s73, %s75
    %p79 = scmp.eq.s32.totalorder %s18, 0
    %p80 = por %p78, %p79
    %p81 = scmp.ne.s32.totalorder %s73, %s75
    %p82 = scmp.eq.s32.totalorder %s23, 2
    %p83 = por %p81, %p82
    %p84 = scmp.ne.s32.totalorder %s75, %s76
    %p85 = scmp.eq.s32.totalorder %s23, 0
    %p86 = por %p84, %p85
    %p87 = scmp.ne.s32.totalorder %s75, %s76
    %p88 = scmp.eq.s32.totalorder %s24, 2
    %p89 = por %p87, %p88
    %p91 = scmp.ne.s32.totalorder %s76, %s90
    %p92 = scmp.eq.s32.totalorder %s24, 0
    %p93 = por %p91, %p92
    %s95 = sadd.s32 %s94, 1
    %p98 = scmp.eq.s32.totalorder %s18, 2
    %p99 = scmp.ne.s32.totalorder %s94, %s96
    %p100 = scmp.eq.s32.totalorder %s18, 0
    %p101 = por %p99, %p100
    %p102 = scmp.ne.s32.totalorder %s94, %s96
    %p103 = scmp.eq.s32.totalorder %s23, 2
    %p104 = por %p102, %p103
    %p105 = scmp.ne.s32.totalorder %s96, %s97
    %p106 = scmp.eq.s32.totalorder %s23, 0
    %p107 = por %p105, %p106
    %p108 = scmp.ne.s32.totalorder %s96, %s97
    %p109 = scmp.eq.s32.totalorder %s24, 2
    %p110 = por %p108, %p109
    %p112 = scmp.ne.s32.totalorder %s97, %s111
    %p113 = scmp.eq.s32.totalorder %s24, 0
    %p114 = por %p112, %p113
    %s116 = sadd.s32 %s115, 1
    %p119 = scmp.eq.s32.totalorder %s18, 2
    %p120 = scmp.ne.s32.totalorder %s115, %s117
    %p121 = scmp.eq.s32.totalorder %s18, 0
    %p122 = por %p120, %p121
    %p123 = scmp.ne.s32.totalorder %s115, %s117
    %p124 = scmp.eq.s32.totalorder %s23, 2
    %p125 = por %p123, %p124
    %p126 = scmp.ne.s32.totalorder %s117, %s118
    %p127 = scmp.eq.s32.totalorder %s23, 0
    %p128 = por %p126, %p127
    %p129 = scmp.ne.s32.totalorder %s117, %s118
    %p130 = scmp.eq.s32.totalorder %s24, 2
    %p131 = por %p129, %p130
    %p133 = scmp.ne.s32.totalorder %s118, %s132
    %p134 = scmp.eq.s32.totalorder %s24, 0
    %p135 = por %p133, %p134
    %s137 = sadd.s32 %s136, 1
    %p140 = scmp.eq.s32.totalorder %s18, 2
    %p141 = scmp.ne.s32.totalorder %s136, %s138
    %p142 = scmp.eq.s32.totalorder %s18, 0
    %p143 = por %p141, %p142
    %p144 = scmp.ne.s32.totalorder %s136, %s138
    %p145 = scmp.eq.s32.totalorder %s23, 2
    %p146 = por %p144, %p145
    %p147 = scmp.ne.s32.totalorder %s138, %s139
    %p148 = scmp.eq.s32.totalorder %s23, 0
    %p149 = por %p147, %p148
    %p150 = scmp.ne.s32.totalorder %s138, %s139
    %p151 = scmp.eq.s32.totalorder %s24, 2
    %p152 = por %p150, %p151
    %p154 = scmp.ne.s32.totalorder %s139, %s153
    %p155 = scmp.eq.s32.totalorder %s24, 0
    %p156 = por %p154, %p155
    %s158 = sadd.s32 %s157, 1
    %p161 = scmp.eq.s32.totalorder %s18, 2
    %p162 = scmp.ne.s32.totalorder %s157, %s159
    %p163 = scmp.eq.s32.totalorder %s18, 0
    %p164 = por %p162, %p163
    %p165 = scmp.ne.s32.totalorder %s157, %s159
    %p166 = scmp.eq.s32.totalorder %s23, 2
    %p167 = por %p165, %p166
    %p168 = scmp.ne.s32.totalorder %s159, %s160
    %p169 = scmp.eq.s32.totalorder %s23, 0
    %p170 = por %p168, %p169
    %p171 = scmp.ne.s32.totalorder %s159, %s160
    %p172 = scmp.eq.s32.totalorder %s24, 2
    %p173 = por %p171, %p172
    %p175 = scmp.ne.s32.totalorder %s160, %s174
    %p176 = scmp.eq.s32.totalorder %s24, 0
    %p177 = por %p175, %p176
    %s179 = sadd.s32 %s178, 1
    %p182 = scmp.eq.s32.totalorder %s18, 2
    %p183 = scmp.ne.s32.totalorder %s178, %s180
    %p184 = scmp.eq.s32.totalorder %s18, 0
    %p185 = por %p183, %p184
    %p186 = scmp.ne.s32.totalorder %s178, %s180
    %p187 = scmp.eq.s32.totalorder %s23, 2
    %p188 = por %p186, %p187
    %p189 = scmp.ne.s32.totalorder %s180, %s181
    %p190 = scmp.eq.s32.totalorder %s23, 0
    %p191 = por %p189, %p190
    %p192 = scmp.ne.s32.totalorder %s180, %s181
    %p193 = scmp.eq.s32.totalorder %s24, 2
    %p194 = por %p192, %p193
    %p196 = scmp.ne.s32.totalorder %s181, %s195
    %p197 = scmp.eq.s32.totalorder %s24, 0
    %p198 = por %p196, %p197
    %s200 = sadd.s32 %s199, 1
    %p203 = scmp.eq.s32.totalorder %s18, 2
    %p204 = scmp.ne.s32.totalorder %s199, %s201
    %p205 = scmp.eq.s32.totalorder %s18, 0
    %p206 = por %p204, %p205
    %p207 = scmp.ne.s32.totalorder %s199, %s201
    %p208 = scmp.eq.s32.totalorder %s23, 2
    %p209 = por %p207, %p208
    %p210 = scmp.ne.s32.totalorder %s201, %s202
    %p211 = scmp.eq.s32.totalorder %s23, 0
    %p212 = por %p210, %p211
    %p213 = scmp.ne.s32.totalorder %s201, %s202
    %p214 = scmp.eq.s32.totalorder %s24, 2
    %p215 = por %p213, %p214
    %p217 = scmp.ne.s32.totalorder %s202, %s216
    %p218 = scmp.eq.s32.totalorder %s24, 0
    %p219 = por %p217, %p218
    %s220 = ssub.s32 %s18, %s25
    %p221 = scmp.eq.s32.totalorder %s220, 0
    %s223 = sadd.s32 %s222, 1
    %s224 = scalar_select %p221, %s222, %s223
    %p227 = pneg %p221
    %p228 = scmp.eq.s32.totalorder %s18, 2
    %p229 = por %p227, %p228
    %p230 = scmp.ne.s32.totalorder %s222, %s225
    %p231 = scmp.eq.s32.totalorder %s18, 0
    %p232 = por %p230, %p231
    %p233 = scmp.ne.s32.totalorder %s222, %s225
    %p234 = scmp.eq.s32.totalorder %s23, 2
    %p235 = por %p233, %p234
    %p236 = scmp.ne.s32.totalorder %s225, %s226
    %p237 = scmp.eq.s32.totalorder %s23, 0
    %p238 = por %p236, %p237
    %p239 = scmp.ne.s32.totalorder %s225, %s226
    %p240 = scmp.eq.s32.totalorder %s24, 2
    %p241 = por %p239, %p240
    %p243 = scmp.ne.s32.totalorder %s226, %s242
    %p244 = scmp.eq.s32.totalorder %s24, 0
    %p245 = por %p243, %p244
    %s246 = ssub.s32 %s18, %s25
    %p247 = scmp.eq.s32.totalorder %s246, 0
    %s249 = sadd.s32 %s248, 1
    %s250 = scalar_select %p247, %s248, %s249
    %p253 = pneg %p247
    %p254 = scmp.eq.s32.totalorder %s18, 2
    %p255 = por %p253, %p254
    %p256 = scmp.ne.s32.totalorder %s248, %s251
    %p257 = scmp.eq.s32.totalorder %s18, 0
    %p258 = por %p256, %p257
    %p259 = scmp.ne.s32.totalorder %s248, %s251
    %p260 = scmp.eq.s32.totalorder %s23, 2
    %p261 = por %p259, %p260
    %p262 = scmp.ne.s32.totalorder %s251, %s252
    %p263 = scmp.eq.s32.totalorder %s23, 0
    %p264 = por %p262, %p263
    %p265 = scmp.ne.s32.totalorder %s251, %s252
    %p266 = scmp.eq.s32.totalorder %s24, 2
    %p267 = por %p265, %p266
    %p269 = scmp.ne.s32.totalorder %s252, %s268
    %p270 = scmp.eq.s32.totalorder %s24, 0
    %p271 = por %p269, %p270
    %s272 = ssub.s32 %s18, %s25
    %p273 = scmp.eq.s32.totalorder %s272, 0
    %s275 = sadd.s32 %s274, 1
    %s276 = scalar_select %p273, %s274, %s275
    %p279 = pneg %p273
    %p280 = scmp.eq.s32.totalorder %s18, 2
    %p281 = por %p279, %p280
    %p282 = scmp.ne.s32.totalorder %s274, %s277
    %p283 = scmp.eq.s32.totalorder %s18, 0
    %p284 = por %p282, %p283
    %p285 = scmp.ne.s32.totalorder %s274, %s277
    %p286 = scmp.eq.s32.totalorder %s23, 2
    %p287 = por %p285, %p286
    %p288 = scmp.ne.s32.totalorder %s277, %s278
    %p289 = scmp.eq.s32.totalorder %s23, 0
    %p290 = por %p288, %p289
    %p291 = scmp.ne.s32.totalorder %s277, %s278
    %p292 = scmp.eq.s32.totalorder %s24, 2
    %p293 = por %p291, %p292
    %p295 = scmp.ne.s32.totalorder %s278, %s294
    %p296 = scmp.eq.s32.totalorder %s24, 0
    %p297 = por %p295, %p296
    %p298 = scmp.le.s32.totalorder 1, %s18
    %p299 = scmp.lt.s32.totalorder %s18, 4
    %p300 = pnand %p298, %p299
    %p301 = pneg %p300
    // Predicated region
    $region9: #{vae_forward.1} parent=5 // pred_check
      _
    $region10: #{vae_forward.1} parent=5 // pred_check_branch
      %303 = sbr.rel (%p300) target = $region12
    $region11: #{vae_forward.1} parent=5 // pred_region
      %s304 = ssub.s32 %s18, 1
      // Predicated region
      $region13: #{vae_forward.1} parent=11 // pred_check
        %p305 = pneg %p65
      $region14: #{vae_forward.1} parent=11 // pred_check_branch
        %307 = sbr.rel (%p305) target = $region16
      $region15: #{vae_forward.1} parent=11 // pred_region
        _
      $region16: #{vae_forward.1} parent=11 // pred_fallthru
        _
      // Predicated region
      $region17: #{vae_forward.1} parent=11 // pred_check
        %p308 = pneg %p86
      $region18: #{vae_forward.1} parent=11 // pred_check_branch
        %310 = sbr.rel (%p308) target = $region20
      $region19: #{vae_forward.1} parent=11 // pred_region
        _
      $region20: #{vae_forward.1} parent=11 // pred_fallthru
        _
      // Predicated region
      $region21: #{vae_forward.1} parent=11 // pred_check
        %p311 = pneg %p107
      $region22: #{vae_forward.1} parent=11 // pred_check_branch
        %313 = sbr.rel (%p311) target = $region24
      $region23: #{vae_forward.1} parent=11 // pred_region
        _
      $region24: #{vae_forward.1} parent=11 // pred_fallthru
        _
      // Predicated region
      $region25: #{vae_forward.1} parent=11 // pred_check
        %p314 = pneg %p128
      $region26: #{vae_forward.1} parent=11 // pred_check_branch
        %316 = sbr.rel (%p314) target = $region28
      $region27: #{vae_forward.1} parent=11 // pred_region
        _
      $region28: #{vae_forward.1} parent=11 // pred_fallthru
        _
      // Predicated region
      $region29: #{vae_forward.1} parent=11 // pred_check
        %p317 = pneg %p149
      $region30: #{vae_forward.1} parent=11 // pred_check_branch
        %319 = sbr.rel (%p317) target = $region32
      $region31: #{vae_forward.1} parent=11 // pred_region
        _
      $region32: #{vae_forward.1} parent=11 // pred_fallthru
        _
      // Predicated region
      $region33: #{vae_forward.1} parent=11 // pred_check
        %p320 = pneg %p170
      $region34: #{vae_forward.1} parent=11 // pred_check_branch
        %322 = sbr.rel (%p320) target = $region36
      $region35: #{vae_forward.1} parent=11 // pred_region
        _
      $region36: #{vae_forward.1} parent=11 // pred_fallthru
        _
      // Predicated region
      $region37: #{vae_forward.1} parent=11 // pred_check
        %p323 = pneg %p191
      $region38: #{vae_forward.1} parent=11 // pred_check_branch
        %325 = sbr.rel (%p323) target = $region40
      $region39: #{vae_forward.1} parent=11 // pred_region
        _
      $region40: #{vae_forward.1} parent=11 // pred_fallthru
        _
      // Predicated region
      $region41: #{vae_forward.1} parent=11 // pred_check
        %p326 = pneg %p212
      $region42: #{vae_forward.1} parent=11 // pred_check_branch
        %328 = sbr.rel (%p326) target = $region44
      $region43: #{vae_forward.1} parent=11 // pred_region
        _
      $region44: #{vae_forward.1} parent=11 // pred_fallthru
        _
    $region12: #{vae_forward.1} parent=5 // pred_fallthru
      _
    %p329 = scmp.lt.s32.totalorder %s18, 3
    // Predicated region
    $region45: #{vae_forward.1} parent=5 // pred_check
      %p330 = pneg %p329
    $region46: #{vae_forward.1} parent=5 // pred_check_branch
      %332 = sbr.rel (%p330) target = $region48
    $region47: #{vae_forward.1} parent=5 // pred_region
      // Predicated region
      $region49: #{vae_forward.1} parent=47 // pred_check
        %p333 = pneg %p38
      $region50: #{vae_forward.1} parent=47 // pred_check_branch
        %335 = sbr.rel (%p333) target = $region52
      $region51: #{vae_forward.1} parent=47 // pred_region
        %s336 = smul.u32 16, %s18
        %p337 = scmp.lt.s32.totalorder %s336, 47
        %s338 = scalar_select %p337, %s336, 47
        %s339 = smul.addr %s338, 2
        %s340 = smul.addr %s339, 8
        %s341 = scalar_lea.vmem %s0, %s340
        %s342 = smul.u32 16, %s18
      $region52: #{vae_forward.1} parent=47 // pred_fallthru
        _
      // Predicated region
      $region53: #{vae_forward.1} parent=47 // pred_check
        %p343 = pneg %p232
      $region54: #{vae_forward.1} parent=47 // pred_check_branch
        %345 = sbr.rel (%p343) target = $region56
      $region55: #{vae_forward.1} parent=47 // pred_region
        %s346 = smul.u32 16, %s18
        %p347 = scmp.lt.s32.totalorder %s346, 47
        %s348 = scalar_select %p347, %s346, 47
        %s349 = smul.addr %s348, 8
        %s350 = scalar_lea.vmem %s9, %s349
        %s351 = smul.u32 16, %s18
      $region56: #{vae_forward.1} parent=47 // pred_fallthru
        _
    $region48: #{vae_forward.1} parent=5 // pred_fallthru
      _
    %p352 = scmp.le.s32.totalorder 1, %s18
    %p353 = scmp.lt.s32.totalorder %s18, 4
    %p354 = pnand %p352, %p353
    %p355 = pneg %p354
    // Predicated region
    $region57: #{vae_forward.1} parent=5 // pred_check
      _
    $region58: #{vae_forward.1} parent=5 // pred_check_branch
      %357 = sbr.rel (%p354) target = $region60
    $region59: #{vae_forward.1} parent=5 // pred_region
      %s358 = ssub.s32 %s18, 1
      %s359 = smul.u32 16, %s23
      %p360 = scmp.lt.s32.totalorder %s359, 47
      %s361 = scalar_select %p360, %s359, 47
      %s362 = smul.addr %s361, 2
      %s363 = smul.addr %s362, 8
      %s364 = scalar_lea.vmem %s0, %s363
      %p365 = pneg %p44
      %p366 = pneg %p41
      %p367 = pneg %p65
      %p368 = pneg %p62
      %p369 = pneg %p86
      %p370 = pneg %p83
      %p371 = pneg %p107
      %p372 = pneg %p104
      %p373 = pneg %p128
      %p374 = pneg %p125
      %p375 = pneg %p149
      %p376 = pneg %p146
      %p377 = pneg %p170
      %p378 = pneg %p167
      %p379 = pneg %p191
      %p380 = pneg %p188
      %p381 = pneg %p212
      %p382 = pneg %p209
      %s383 = smul.u32 16, %s23
      %p384 = scmp.lt.s32.totalorder %s383, 47
      %s385 = scalar_select %p384, %s383, 47
      %s386 = smul.addr %s385, 8
      %s387 = scalar_lea.vmem %s9, %s386
      %p388 = pneg %p238
      %p389 = pneg %p235
      %p390 = pneg %p264
      %p391 = pneg %p261
      %s392 = smul.u32 16, %s23
      %p393 = scmp.lt.s32.totalorder %s392, 47
      %s394 = scalar_select %p393, %s392, 47
      %s395 = smul.addr %s394, 2
      %s396 = smul.addr %s395, 8
      %s397 = scalar_lea.vmem %s10, %s396
      %p398 = pneg %p290
      %p399 = pneg %p287
      %s400 = smul.u32 16, %s23
      %p401 = scmp.lt.s32.totalorder %s400, 47
      %s402 = scalar_select %p401, %s400, 47
      %s403 = smul.addr %s402, 8
      %s404 = scalar_lea.vmem %s11, %s403
      %s405 = smul.u32 16, %s23
      %p406 = scmp.lt.s32.totalorder %s405, 47
      %s407 = scalar_select %p406, %s405, 47
      %s408 = smul.addr %s407, 2
      %s409 = smul.addr %s408, 8
      %s410 = scalar_lea.vmem %s0, %s409
      %s411 = smul.u32 16, %s23
      %s412 = smul.u32 16, %s23
      %p413 = scmp.lt.s32.totalorder %s412, 47
      %s414 = scalar_select %p413, %s412, 47
      %s415 = smul.addr %s414, 8
      %s416 = scalar_lea.vmem %s9, %s415
      %s417 = smul.u32 16, %s23
      %s418 = smul.u32 16, %s23
      %p419 = scmp.lt.s32.totalorder %s418, 47
      %s420 = scalar_select %p419, %s418, 47
      %s421 = smul.addr %s420, 2
      %s422 = smul.addr %s421, 8
      %s423 = scalar_lea.vmem %s10, %s422
      %s424 = smul.u32 16, %s23
      %s425 = smul.u32 16, %s23
      %p426 = scmp.lt.s32.totalorder %s425, 47
      %s427 = scalar_select %p426, %s425, 47
      %s428 = smul.addr %s427, 8
      %s429 = scalar_lea.vmem %s11, %s428
      %s430 = smul.u32 16, %s23
      %v432 = vld [vmem:[%s410] sm:$0xff]
      %v433 = vld [vmem:[%s410 + $0x8] sm:$0xff]
      %v434 = vld [vmem:[%s410 + $0x10] sm:$0xff]
      %v435 = vld [vmem:[%s410 + $0x18] sm:$0xff]
      %v436 = vld [vmem:[%s410 + $0x20] sm:$0xff]
      %v437 = vld [vmem:[%s410 + $0x28] sm:$0xff]
      %v438 = vld [vmem:[%s410 + $0x30] sm:$0xff]
      %v439 = vld [vmem:[%s410 + $0x38] sm:$0xff]
      %v440 = vld [vmem:[%s410 + $0x40] sm:$0xff]
      %v441 = vld [vmem:[%s410 + $0x48] sm:$0xff]
      %v442 = vld [vmem:[%s410 + $0x50] sm:$0xff]
      %v443 = vld [vmem:[%s410 + $0x58] sm:$0xff]
      %v444 = vld [vmem:[%s410 + $0x60] sm:$0xff]
      %v445 = vld [vmem:[%s410 + $0x68] sm:$0xff]
      %v446 = vld [vmem:[%s410 + $0x70] sm:$0xff]
      %v447 = vld [vmem:[%s410 + $0x78] sm:$0xff]
      %v448 = vld [vmem:[%s410 + $0x80] sm:$0xff]
      %v449 = vld [vmem:[%s410 + $0x88] sm:$0xff]
      %v450 = vld [vmem:[%s410 + $0x90] sm:$0xff]
      %v451 = vld [vmem:[%s410 + $0x98] sm:$0xff]
      %v452 = vld [vmem:[%s410 + $0xa0] sm:$0xff]
      %v453 = vld [vmem:[%s410 + $0xa8] sm:$0xff]
      %v454 = vld [vmem:[%s410 + $0xb0] sm:$0xff]
      %v455 = vld [vmem:[%s410 + $0xb8] sm:$0xff]
      %v456 = vld [vmem:[%s410 + $0xc0] sm:$0xff]
      %v457 = vld [vmem:[%s410 + $0xc8] sm:$0xff]
      %v458 = vld [vmem:[%s410 + $0xd0] sm:$0xff]
      %v459 = vld [vmem:[%s410 + $0xd8] sm:$0xff]
      %v460 = vld [vmem:[%s410 + $0xe0] sm:$0xff]
      %v461 = vld [vmem:[%s410 + $0xe8] sm:$0xff]
      %v462 = vld [vmem:[%s410 + $0xf0] sm:$0xff]
      %v463 = vld [vmem:[%s410 + $0xf8] sm:$0xff]
      %v464 = vpack.c.bf16 %v434, %v432
      %v465 = vpack.c.bf16 %v435, %v433
      %v466 = vpack.c.bf16 %v438, %v436
      %v467 = vpack.c.bf16 %v439, %v437
      %v468 = vpack.c.bf16 %v442, %v440
      %v469 = vpack.c.bf16 %v443, %v441
      %v470 = vpack.c.bf16 %v446, %v444
      %v471 = vpack.c.bf16 %v447, %v445
      %v472 = vpack.c.bf16 %v450, %v448
      %v473 = vpack.c.bf16 %v451, %v449
      %v474 = vpack.c.bf16 %v454, %v452
      %v475 = vpack.c.bf16 %v455, %v453
      %v476 = vpack.c.bf16 %v458, %v456
      %v477 = vpack.c.bf16 %v459, %v457
      %v478 = vpack.c.bf16 %v462, %v460
      %v479 = vpack.c.bf16 %v463, %v461
      %v480 = vld [vmem:[%s1] sm:$0xff]
      %v481 = vld [vmem:[%s1 + $0x8] sm:$0xff]
      %v482 = vld [vmem:[%s1 + $0x10] sm:$0xff]
      %v483 = vld [vmem:[%s1 + $0x18] sm:$0xff]
      %v484 = vld [vmem:[%s1 + $0x20] sm:$0xff]
      %v485 = vld [vmem:[%s1 + $0x28] sm:$0xff]
      %v486 = vld [vmem:[%s1 + $0x30] sm:$0xff]
      %v487 = vld [vmem:[%s1 + $0x38] sm:$0xff]
      %v488 = vld [vmem:[%s1 + $0x40] sm:$0xff]
      %v489 = vld [vmem:[%s1 + $0x48] sm:$0xff]
      %v490 = vld [vmem:[%s1 + $0x50] sm:$0xff]
      %v491 = vld [vmem:[%s1 + $0x58] sm:$0xff]
      %v492 = vld [vmem:[%s1 + $0x60] sm:$0xff]
      %v493 = vld [vmem:[%s1 + $0x68] sm:$0xff]
      %v494 = vld [vmem:[%s1 + $0x70] sm:$0xff]
      %v495 = vld [vmem:[%s1 + $0x78] sm:$0xff]
      %v496 = vld [vmem:[%s1 + $0x80] sm:$0xff]
      %v497 = vld [vmem:[%s1 + $0x88] sm:$0xff]
      %v498 = vld [vmem:[%s1 + $0x90] sm:$0xff]
      %v499 = vld [vmem:[%s1 + $0x98] sm:$0xff]
      %v500 = vld [vmem:[%s1 + $0xa0] sm:$0xff]
      %v501 = vld [vmem:[%s1 + $0xa8] sm:$0xff]
      %v502 = vld [vmem:[%s1 + $0xb0] sm:$0xff]
      %v503 = vld [vmem:[%s1 + $0xb8] sm:$0xff]
      %v504 = vld [vmem:[%s1 + $0xc0] sm:$0xff]
      %v505 = vld [vmem:[%s1 + $0xc8] sm:$0xff]
      %v506 = vld [vmem:[%s1 + $0xd0] sm:$0xff]
      %v507 = vld [vmem:[%s1 + $0xd8] sm:$0xff]
      %v508 = vld [vmem:[%s1 + $0xe0] sm:$0xff]
      %v509 = vld [vmem:[%s1 + $0xe8] sm:$0xff]
      %v510 = vld [vmem:[%s1 + $0xf0] sm:$0xff]
      %v511 = vld [vmem:[%s1 + $0xf8] sm:$0xff]
      %v512 = vld [vmem:[%s2] sm:$0x3]
      %v514 = vlaneseq
      %v515 = vshrl.u32 %v514, 7
      %v516 = vsub.s32 0, %v515
      %v517 = vrot.slane %v512, %v516
      %v518 = vlaneseq
      %v519 = vshrl.u32 %v518, 7
      %v520 = vsub.s32 1, %v519
      %v521 = vrot.slane %v512, %v520
      %v556 = vunpack.c.l.b16 %v480
      %v557 = vunpack.c.h.b16 %v480
      %v558 = vunpack.c.l.b16 %v481
      %v559 = vunpack.c.h.b16 %v481
      %v560 = vunpack.c.l.b16 %v482
      %v561 = vunpack.c.h.b16 %v482
      %v562 = vunpack.c.l.b16 %v483
      %v563 = vunpack.c.h.b16 %v483
      %v564 = vunpack.c.l.b16 %v484
      %v565 = vunpack.c.h.b16 %v484
      %v566 = vunpack.c.l.b16 %v485
      %v567 = vunpack.c.h.b16 %v485
      %v568 = vunpack.c.l.b16 %v486
      %v569 = vunpack.c.h.b16 %v486
      %v570 = vunpack.c.l.b16 %v487
      %v571 = vunpack.c.h.b16 %v487
      %v572 = vunpack.c.l.b16 %v488
      %v573 = vunpack.c.h.b16 %v488
      %v574 = vunpack.c.l.b16 %v489
      %v575 = vunpack.c.h.b16 %v489
      %v576 = vunpack.c.l.b16 %v490
      %v577 = vunpack.c.h.b16 %v490
      %v578 = vunpack.c.l.b16 %v491
      %v579 = vunpack.c.h.b16 %v491
      %v580 = vunpack.c.l.b16 %v492
      %v581 = vunpack.c.h.b16 %v492
      %v582 = vunpack.c.l.b16 %v493
      %v583 = vunpack.c.h.b16 %v493
      %v584 = vunpack.c.l.b16 %v494
      %v585 = vunpack.c.h.b16 %v494
      %v586 = vunpack.c.l.b16 %v495
      %v587 = vunpack.c.h.b16 %v495
      %v588 = vunpack.c.l.b16 %v496
      %v589 = vunpack.c.h.b16 %v496
      %v590 = vunpack.c.l.b16 %v497
      %v591 = vunpack.c.h.b16 %v497
      %v592 = vunpack.c.l.b16 %v498
      %v593 = vunpack.c.h.b16 %v498
      %v594 = vunpack.c.l.b16 %v499
      %v595 = vunpack.c.h.b16 %v499
      %v596 = vunpack.c.l.b16 %v500
      %v597 = vunpack.c.h.b16 %v500
      %v598 = vunpack.c.l.b16 %v501
      %v599 = vunpack.c.h.b16 %v501
      %v600 = vunpack.c.l.b16 %v502
      %v601 = vunpack.c.h.b16 %v502
      %v602 = vunpack.c.l.b16 %v503
      %v603 = vunpack.c.h.b16 %v503
      %v604 = vunpack.c.l.b16 %v504
      %v605 = vunpack.c.h.b16 %v504
      %v606 = vunpack.c.l.b16 %v505
      %v607 = vunpack.c.h.b16 %v505
      %v608 = vunpack.c.l.b16 %v506
      %v609 = vunpack.c.h.b16 %v506
      %v610 = vunpack.c.l.b16 %v507
      %v611 = vunpack.c.h.b16 %v507
      %v612 = vunpack.c.l.b16 %v508
      %v613 = vunpack.c.h.b16 %v508
      %v614 = vunpack.c.l.b16 %v509
      %v615 = vunpack.c.h.b16 %v509
      %v616 = vunpack.c.l.b16 %v510
      %v617 = vunpack.c.h.b16 %v510
      %v618 = vunpack.c.l.b16 %v511
      %v619 = vunpack.c.h.b16 %v511
      %v620 = vpack.c.b16 %v558, %v556
      %v621 = vpack.c.b16 %v559, %v557
      %v622 = vpack.c.b16 %v562, %v560
      %v623 = vpack.c.b16 %v563, %v561
      %v624 = vpack.c.b16 %v566, %v564
      %v625 = vpack.c.b16 %v567, %v565
      %v626 = vpack.c.b16 %v570, %v568
      %v627 = vpack.c.b16 %v571, %v569
      %v628 = vpack.c.b16 %v574, %v572
      %v629 = vpack.c.b16 %v575, %v573
      %v630 = vpack.c.b16 %v578, %v576
      %v631 = vpack.c.b16 %v579, %v577
      %v632 = vpack.c.b16 %v582, %v580
      %v633 = vpack.c.b16 %v583, %v581
      %v634 = vpack.c.b16 %v586, %v584
      %v635 = vpack.c.b16 %v587, %v585
      %v636 = vpack.c.b16 %v590, %v588
      %v637 = vpack.c.b16 %v591, %v589
      %v638 = vpack.c.b16 %v594, %v592
      %v639 = vpack.c.b16 %v595, %v593
      %v640 = vpack.c.b16 %v598, %v596
      %v641 = vpack.c.b16 %v599, %v597
      %v642 = vpack.c.b16 %v602, %v600
      %v643 = vpack.c.b16 %v603, %v601
      %v644 = vpack.c.b16 %v606, %v604
      %v645 = vpack.c.b16 %v607, %v605
      %v646 = vpack.c.b16 %v610, %v608
      %v647 = vpack.c.b16 %v611, %v609
      %v648 = vpack.c.b16 %v614, %v612
      %v649 = vpack.c.b16 %v615, %v613
      %v650 = vpack.c.b16 %v618, %v616
      %v651 = vpack.c.b16 %v619, %v617
      %684 = vmatprep.subr.bf16.mxu0 %v621
      %685 = vmatpush1.bf16.msra.mxu0 %v620
      %686 = vmatprep.subr.bf16.mxu0 %v623
      %687 = vmatpush1.bf16.msra.mxu0 %v622
      %688 = vmatprep.subr.bf16.mxu0 %v625
      %689 = vmatpush1.bf16.msra.mxu0 %v624
      %690 = vmatprep.subr.bf16.mxu0 %v627
      %691 = vmatpush1.bf16.msra.mxu0 %v626
      %692 = vmatprep.subr.bf16.mxu0 %v629
      %693 = vmatpush1.bf16.msra.mxu0 %v628
      %694 = vmatprep.subr.bf16.mxu0 %v631
      %695 = vmatpush1.bf16.msra.mxu0 %v630
      %696 = vmatprep.subr.bf16.mxu0 %v633
      %697 = vmatpush1.bf16.msra.mxu0 %v632
      %698 = vmatprep.subr.bf16.mxu0 %v635
      %699 = vmatpush1.bf16.msra.mxu0 %v634
      %700 = vmatprep.subr.bf16.mxu0 %v637
      %701 = vmatpush1.bf16.msra.mxu0 %v636
      %702 = vmatprep.subr.bf16.mxu0 %v639
      %703 = vmatpush1.bf16.msra.mxu0 %v638
      %704 = vmatprep.subr.bf16.mxu0 %v641
      %705 = vmatpush1.bf16.msra.mxu0 %v640
      %706 = vmatprep.subr.bf16.mxu0 %v643
      %707 = vmatpush1.bf16.msra.mxu0 %v642
      %708 = vmatprep.subr.bf16.mxu0 %v645
      %709 = vmatpush1.bf16.msra.mxu0 %v644
      %710 = vmatprep.subr.bf16.mxu0 %v647
      %711 = vmatpush1.bf16.msra.mxu0 %v646
      %712 = vmatprep.subr.bf16.mxu0 %v649
      %713 = vmatpush1.bf16.msra.mxu0 %v648
      %714 = vmatprep.subr.bf16.mxu0 %v651
      %715 = vmatpush1.bf16.msra.mxu0 %v650
      %716 = vmatprep.mubr.bf16.mxu0 %v465
      %717 = vmatmul.mubr.bf16.gmra.mrb[0].mxu0 %v464
      %v718 = vpop.f32.mrb[0].mxu0
      %v719 = vadd.f32 %v517, %v718
      %v720 = vpop.f32.mrb[0].mxu0
      %v721 = vadd.f32 %v521, %v720
      %v722 = vpop.f32.mrb[0].mxu0
      %v723 = vadd.f32 %v517, %v722
      %v724 = vpop.f32.mrb[0].mxu0
      %v725 = vadd.f32 %v521, %v724
      %726 = vmatprep.mubr.bf16.mxu0 %v467
      %727 = vmatmul.mubr.bf16.gmra.mrb[0].mxu0 %v466
      %v728 = vpop.f32.mrb[0].mxu0
      %v729 = vadd.f32 %v517, %v728
      %v730 = vpop.f32.mrb[0].mxu0
      %v731 = vadd.f32 %v521, %v730
      %v732 = vpop.f32.mrb[0].mxu0
      %v733 = vadd.f32 %v517, %v732
      %v734 = vpop.f32.mrb[0].mxu0
      %v735 = vadd.f32 %v521, %v734
      %736 = vmatprep.mubr.bf16.mxu0 %v469
      %737 = vmatmul.mubr.bf16.gmra.mrb[0].mxu0 %v468
      %v738 = vpop.f32.mrb[0].mxu0
      %v739 = vadd.f32 %v517, %v738
      %v740 = vpop.f32.mrb[0].mxu0
      %v741 = vadd.f32 %v521, %v740
      %v742 = vpop.f32.mrb[0].mxu0
      %v743 = vadd.f32 %v517, %v742
      %v744 = vpop.f32.mrb[0].mxu0
      %v745 = vadd.f32 %v521, %v744
      %746 = vmatprep.mubr.bf16.mxu0 %v471
      %747 = vmatmul.mubr.bf16.gmra.mrb[0].mxu0 %v470
      %v748 = vpop.f32.mrb[0].mxu0
      %v749 = vadd.f32 %v517, %v748
      %v750 = vpop.f32.mrb[0].mxu0
      %v751 = vadd.f32 %v521, %v750
      %v752 = vpop.f32.mrb[0].mxu0
      %v753 = vadd.f32 %v517, %v752
      %v754 = vpop.f32.mrb[0].mxu0
      %v755 = vadd.f32 %v521, %v754
      %756 = vmatprep.mubr.bf16.mxu0 %v473
      %757 = vmatmul.mubr.bf16.gmra.mrb[0].mxu0 %v472
      %v758 = vpop.f32.mrb[0].mxu0
      %v759 = vadd.f32 %v517, %v758
      %v760 = vpop.f32.mrb[0].mxu0
      %v761 = vadd.f32 %v521, %v760
      %v762 = vpop.f32.mrb[0].mxu0
      %v763 = vadd.f32 %v517, %v762
      %v764 = vpop.f32.mrb[0].mxu0
      %v765 = vadd.f32 %v521, %v764
      %766 = vmatprep.mubr.bf16.mxu0 %v475
      %767 = vmatmul.mubr.bf16.gmra.mrb[0].mxu0 %v474
      %v768 = vpop.f32.mrb[0].mxu0
      %v769 = vadd.f32 %v517, %v768
      %v770 = vpop.f32.mrb[0].mxu0
      %v771 = vadd.f32 %v521, %v770
      %v772 = vpop.f32.mrb[0].mxu0
      %v773 = vadd.f32 %v517, %v772
      %v774 = vpop.f32.mrb[0].mxu0
      %v775 = vadd.f32 %v521, %v774
      %776 = vmatprep.mubr.bf16.mxu0 %v477
      %777 = vmatmul.mubr.bf16.gmra.mrb[0].mxu0 %v476
      %v778 = vpop.f32.mrb[0].mxu0
      %v779 = vadd.f32 %v517, %v778
      %v780 = vpop.f32.mrb[0].mxu0
      %v781 = vadd.f32 %v521, %v780
      %v782 = vpop.f32.mrb[0].mxu0
      %v783 = vadd.f32 %v517, %v782
      %v784 = vpop.f32.mrb[0].mxu0
      %v785 = vadd.f32 %v521, %v784
      %786 = vmatprep.mubr.bf16.mxu0 %v479
      %787 = vmatmul.mubr.bf16.gmra.mrb[0].mxu0 %v478
      %v788 = vpop.f32.mrb[0].mxu0
      %v789 = vadd.f32 %v517, %v788
      %v790 = vpop.f32.mrb[0].mxu0
      %v791 = vadd.f32 %v521, %v790
      %v792 = vpop.f32.mrb[0].mxu0
      %v793 = vadd.f32 %v517, %v792
      %v794 = vpop.f32.mrb[0].mxu0
      %v795 = vadd.f32 %v521, %v794
      %796 = vdwg.mxu0
      %v797 = vmax.f32 %v719, 0.0
      %v798 = vmax.f32 %v721, 0.0
      %v799 = vmax.f32 %v723, 0.0
      %v800 = vmax.f32 %v725, 0.0
      %v801 = vmax.f32 %v729, 0.0
      %v802 = vmax.f32 %v731, 0.0
      %v803 = vmax.f32 %v733, 0.0
      %v804 = vmax.f32 %v735, 0.0
      %v805 = vmax.f32 %v739, 0.0
      %v806 = vmax.f32 %v741, 0.0
      %v807 = vmax.f32 %v743, 0.0
      %v808 = vmax.f32 %v745, 0.0
      %v809 = vmax.f32 %v749, 0.0
      %v810 = vmax.f32 %v751, 0.0
      %v811 = vmax.f32 %v753, 0.0
      %v812 = vmax.f32 %v755, 0.0
      %v813 = vmax.f32 %v759, 0.0
      %v814 = vmax.f32 %v761, 0.0
      %v815 = vmax.f32 %v763, 0.0
      %v816 = vmax.f32 %v765, 0.0
      %v817 = vmax.f32 %v769, 0.0
      %v818 = vmax.f32 %v771, 0.0
      %v819 = vmax.f32 %v773, 0.0
      %v820 = vmax.f32 %v775, 0.0
      %v821 = vmax.f32 %v779, 0.0
      %v822 = vmax.f32 %v781, 0.0
      %v823 = vmax.f32 %v783, 0.0
      %v824 = vmax.f32 %v785, 0.0
      %v825 = vmax.f32 %v789, 0.0
      %v826 = vmax.f32 %v791, 0.0
      %v827 = vmax.f32 %v793, 0.0
      %v828 = vmax.f32 %v795, 0.0
      %v829 = vpack.c.bf16 %v799, %v797
      %v830 = vpack.c.bf16 %v800, %v798
      %v831 = vpack.c.bf16 %v803, %v801
      %v832 = vpack.c.bf16 %v804, %v802
      %v833 = vpack.c.bf16 %v807, %v805
      %v834 = vpack.c.bf16 %v808, %v806
      %v835 = vpack.c.bf16 %v811, %v809
      %v836 = vpack.c.bf16 %v812, %v810
      %v837 = vpack.c.bf16 %v815, %v813
      %v838 = vpack.c.bf16 %v816, %v814
      %v839 = vpack.c.bf16 %v819, %v817
      %v840 = vpack.c.bf16 %v820, %v818
      %v841 = vpack.c.bf16 %v823, %v821
      %v842 = vpack.c.bf16 %v824, %v822
      %v843 = vpack.c.bf16 %v827, %v825
      %v844 = vpack.c.bf16 %v828, %v826
      %v845 = vld [vmem:[%s3] sm:$0xf]
      %v846 = vld [vmem:[%s3 + $0x4] sm:$0xf]
      %v847 = vld [vmem:[%s3 + $0x8] sm:$0xf]
      %v848 = vld [vmem:[%s3 + $0xc] sm:$0xf]
      %v849 = vld [vmem:[%s3 + $0x10] sm:$0xf]
      %v850 = vld [vmem:[%s3 + $0x14] sm:$0xf]
      %v851 = vld [vmem:[%s3 + $0x18] sm:$0xf]
      %v852 = vld [vmem:[%s3 + $0x1c] sm:$0xf]
      %v853 = vld [vmem:[%s3 + $0x20] sm:$0xf]
      %v854 = vld [vmem:[%s3 + $0x24] sm:$0xf]
      %v855 = vld [vmem:[%s3 + $0x28] sm:$0xf]
      %v856 = vld [vmem:[%s3 + $0x2c] sm:$0xf]
      %v857 = vld [vmem:[%s3 + $0x30] sm:$0xf]
      %v858 = vld [vmem:[%s3 + $0x34] sm:$0xf]
      %v859 = vld [vmem:[%s3 + $0x38] sm:$0xf]
      %v860 = vld [vmem:[%s3 + $0x3c] sm:$0xf]
      %v861 = vld [vmem:[%s3 + $0x40] sm:$0xf]
      %v862 = vld [vmem:[%s3 + $0x44] sm:$0xf]
      %v863 = vld [vmem:[%s3 + $0x48] sm:$0xf]
      %v864 = vld [vmem:[%s3 + $0x4c] sm:$0xf]
      %v865 = vld [vmem:[%s3 + $0x50] sm:$0xf]
      %v866 = vld [vmem:[%s3 + $0x54] sm:$0xf]
      %v867 = vld [vmem:[%s3 + $0x58] sm:$0xf]
      %v868 = vld [vmem:[%s3 + $0x5c] sm:$0xf]
      %v869 = vld [vmem:[%s3 + $0x60] sm:$0xf]
      %v870 = vld [vmem:[%s3 + $0x64] sm:$0xf]
      %v871 = vld [vmem:[%s3 + $0x68] sm:$0xf]
      %v872 = vld [vmem:[%s3 + $0x6c] sm:$0xf]
      %v873 = vld [vmem:[%s3 + $0x70] sm:$0xf]
      %v874 = vld [vmem:[%s3 + $0x74] sm:$0xf]
      %v875 = vld [vmem:[%s3 + $0x78] sm:$0xf]
      %v876 = vld [vmem:[%s3 + $0x7c] sm:$0xf]
      %v877 = vld [vmem:[%s4] sm:$0x1]
      %v879 = vlaneseq
      %v880 = vshrl.u32 %v879, 7
      %v881 = vsub.s32 0, %v880
      %v882 = vrot.slane %v877, %v881
      %v916 = vunpack.c.l.b16 %v845
      %v917 = vunpack.c.l.b16 %v846
      %v918 = vunpack.c.l.b16 %v847
      %v919 = vunpack.c.l.b16 %v848
      %v920 = vunpack.c.l.b16 %v849
      %v921 = vunpack.c.l.b16 %v850
      %v922 = vunpack.c.l.b16 %v851
      %v923 = vunpack.c.l.b16 %v852
      %v924 = vunpack.c.l.b16 %v853
      %v925 = vunpack.c.l.b16 %v854
      %v926 = vunpack.c.l.b16 %v855
      %v927 = vunpack.c.l.b16 %v856
      %v928 = vunpack.c.l.b16 %v857
      %v929 = vunpack.c.l.b16 %v858
      %v930 = vunpack.c.l.b16 %v859
      %v931 = vunpack.c.l.b16 %v860
      %v932 = vunpack.c.l.b16 %v861
      %v933 = vunpack.c.l.b16 %v862
      %v934 = vunpack.c.l.b16 %v863
      %v935 = vunpack.c.l.b16 %v864
      %v936 = vunpack.c.l.b16 %v865
      %v937 = vunpack.c.l.b16 %v866
      %v938 = vunpack.c.l.b16 %v867
      %v939 = vunpack.c.l.b16 %v868
      %v940 = vunpack.c.l.b16 %v869
      %v941 = vunpack.c.l.b16 %v870
      %v942 = vunpack.c.l.b16 %v871
      %v943 = vunpack.c.l.b16 %v872
      %v944 = vunpack.c.l.b16 %v873
      %v945 = vunpack.c.l.b16 %v874
      %v946 = vunpack.c.l.b16 %v875
      %v947 = vunpack.c.l.b16 %v876
      %v948 = vpack.c.b16 %v917, %v916
      %v949 = vpack.c.b16 %v919, %v918
      %v950 = vpack.c.b16 %v921, %v920
      %v951 = vpack.c.b16 %v923, %v922
      %v952 = vpack.c.b16 %v925, %v924
      %v953 = vpack.c.b16 %v927, %v926
      %v954 = vpack.c.b16 %v929, %v928
      %v955 = vpack.c.b16 %v931, %v930
      %v956 = vpack.c.b16 %v933, %v932
      %v957 = vpack.c.b16 %v935, %v934
      %v958 = vpack.c.b16 %v937, %v936
      %v959 = vpack.c.b16 %v939, %v938
      %v960 = vpack.c.b16 %v941, %v940
      %v961 = vpack.c.b16 %v943, %v942
      %v962 = vpack.c.b16 %v945, %v944
      %v963 = vpack.c.b16 %v947, %v946
      %980 = vmatprep.subr.bf16.mxu0 0
      %981 = vmatpush1.bf16.msra.mxu0 %v948
      %982 = vmatprep.subr.bf16.mxu0 0
      %983 = vmatpush1.bf16.msra.mxu0 %v949
      %984 = vmatprep.subr.bf16.mxu0 0
      %985 = vmatpush1.bf16.msra.mxu0 %v950
      %986 = vmatprep.subr.bf16.mxu0 0
      %987 = vmatpush1.bf16.msra.mxu0 %v951
      %988 = vmatprep.subr.bf16.mxu0 0
      %989 = vmatpush1.bf16.msra.mxu0 %v952
      %990 = vmatprep.subr.bf16.mxu0 0
      %991 = vmatpush1.bf16.msra.mxu0 %v953
      %992 = vmatprep.subr.bf16.mxu0 0
      %993 = vmatpush1.bf16.msra.mxu0 %v954
      %994 = vmatprep.subr.bf16.mxu0 0
      %995 = vmatpush1.bf16.msra.mxu0 %v955
      %996 = vmatprep.subr.bf16.mxu0 0
      %997 = vmatpush1.bf16.msra.mxu0 %v956
      %998 = vmatprep.subr.bf16.mxu0 0
      %999 = vmatpush1.bf16.msra.mxu0 %v957
      %1000 = vmatprep.subr.bf16.mxu0 0
      %1001 = vmatpush1.bf16.msra.mxu0 %v958
      %1002 = vmatprep.subr.bf16.mxu0 0
      %1003 = vmatpush1.bf16.msra.mxu0 %v959
      %1004 = vmatprep.subr.bf16.mxu0 0
      %1005 = vmatpush1.bf16.msra.mxu0 %v960
      %1006 = vmatprep.subr.bf16.mxu0 0
      %1007 = vmatpush1.bf16.msra.mxu0 %v961
      %1008 = vmatprep.subr.bf16.mxu0 0
      %1009 = vmatpush1.bf16.msra.mxu0 %v962
      %1010 = vmatprep.subr.bf16.mxu0 0
      %1011 = vmatpush1.bf16.msra.mxu0 %v963
      %1012 = vmatprep.mubr.bf16.mxu0 %v830
      %1013 = vmatmul.mubr.bf16.gmra.mrb[0].mxu0 %v829
      %v1014 = vpop.f32.mrb[0].mxu0
      %v1015 = vadd.f32 %v882, %v1014
      %v1016 = vpop.f32.mrb[0].mxu0
      %v1017 = vpop.f32.mrb[0].mxu0
      %v1018 = vadd.f32 %v882, %v1017
      %v1019 = vpop.f32.mrb[0].mxu0
      %1020 = vmatprep.mubr.bf16.mxu0 %v832
      %1021 = vmatmul.mubr.bf16.gmra.mrb[0].mxu0 %v831
      %v1022 = vpop.f32.mrb[0].mxu0
      %v1023 = vadd.f32 %v882, %v1022
      %v1024 = vpop.f32.mrb[0].mxu0
      %v1025 = vpop.f32.mrb[0].mxu0
      %v1026 = vadd.f32 %v882, %v1025
      %v1027 = vpop.f32.mrb[0].mxu0
      %1028 = vmatprep.mubr.bf16.mxu0 %v834
      %1029 = vmatmul.mubr.bf16.gmra.mrb[0].mxu0 %v833
      %v1030 = vpop.f32.mrb[0].mxu0
      %v1031 = vadd.f32 %v882, %v1030
      %v1032 = vpop.f32.mrb[0].mxu0
      %v1033 = vpop.f32.mrb[0].mxu0
      %v1034 = vadd.f32 %v882, %v1033
      %v1035 = vpop.f32.mrb[0].mxu0
      %1036 = vmatprep.mubr.bf16.mxu0 %v836
      %1037 = vmatmul.mubr.bf16.gmra.mrb[0].mxu0 %v835
      %v1038 = vpop.f32.mrb[0].mxu0
      %v1039 = vadd.f32 %v882, %v1038
      %v1040 = vpop.f32.mrb[0].mxu0
      %v1041 = vpop.f32.mrb[0].mxu0
      %v1042 = vadd.f32 %v882, %v1041
      %v1043 = vpop.f32.mrb[0].mxu0
      %1044 = vmatprep.mubr.bf16.mxu0 %v838
      %1045 = vmatmul.mubr.bf16.gmra.mrb[0].mxu0 %v837
      %v1046 = vpop.f32.mrb[0].mxu0
      %v1047 = vadd.f32 %v882, %v1046
      %v1048 = vpop.f32.mrb[0].mxu0
      %v1049 = vpop.f32.mrb[0].mxu0
      %v1050 = vadd.f32 %v882, %v1049
      %v1051 = vpop.f32.mrb[0].mxu0
      %1052 = vmatprep.mubr.bf16.mxu0 %v840
      %1053 = vmatmul.mubr.bf16.gmra.mrb[0].mxu0 %v839
      %v1054 = vpop.f32.mrb[0].mxu0
      %v1055 = vadd.f32 %v882, %v1054
      %v1056 = vpop.f32.mrb[0].mxu0
      %v1057 = vpop.f32.mrb[0].mxu0
      %v1058 = vadd.f32 %v882, %v1057
      %v1059 = vpop.f32.mrb[0].mxu0
      %1060 = vmatprep.mubr.bf16.mxu0 %v842
      %1061 = vmatmul.mubr.bf16.gmra.mrb[0].mxu0 %v841
      %v1062 = vpop.f32.mrb[0].mxu0
      %v1063 = vadd.f32 %v882, %v1062
      %v1064 = vpop.f32.mrb[0].mxu0
      %v1065 = vpop.f32.mrb[0].mxu0
      %v1066 = vadd.f32 %v882, %v1065
      %v1067 = vpop.f32.mrb[0].mxu0
      %1068 = vmatprep.mubr.bf16.mxu0 %v844
      %1069 = vmatmul.mubr.bf16.gmra.mrb[0].mxu0 %v843
      %v1070 = vpop.f32.mrb[0].mxu0
      %v1071 = vadd.f32 %v882, %v1070
      %v1072 = vpop.f32.mrb[0].mxu0
      %v1073 = vpop.f32.mrb[0].mxu0
      %v1074 = vadd.f32 %v882, %v1073
      %v1075 = vpop.f32.mrb[0].mxu0
      %1076 = vdwg.mxu0
      %v1077 = vld [vmem:[%s416] sm:$0xff]
      %v1078 = vld [vmem:[%s416 + $0x8] sm:$0xff]
      %v1079 = vld [vmem:[%s416 + $0x10] sm:$0xff]
      %v1080 = vld [vmem:[%s416 + $0x18] sm:$0xff]
      %v1081 = vld [vmem:[%s416 + $0x20] sm:$0xff]
      %v1082 = vld [vmem:[%s416 + $0x28] sm:$0xff]
      %v1083 = vld [vmem:[%s416 + $0x30] sm:$0xff]
      %v1084 = vld [vmem:[%s416 + $0x38] sm:$0xff]
      %v1085 = vld [vmem:[%s416 + $0x40] sm:$0xff]
      %v1086 = vld [vmem:[%s416 + $0x48] sm:$0xff]
      %v1087 = vld [vmem:[%s416 + $0x50] sm:$0xff]
      %v1088 = vld [vmem:[%s416 + $0x58] sm:$0xff]
      %v1089 = vld [vmem:[%s416 + $0x60] sm:$0xff]
      %v1090 = vld [vmem:[%s416 + $0x68] sm:$0xff]
      %v1091 = vld [vmem:[%s416 + $0x70] sm:$0xff]
      %v1092 = vld [vmem:[%s416 + $0x78] sm:$0xff]
      %1109 = vrot.lane.b32.xlu0 %v1077, 64
      %v1110 = vpop.permute.xlu0 %1109
      %1111 = vrot.lane.b32.xlu0 %v1078, 64
      %v1112 = vpop.permute.xlu0 %1111
      %1113 = vrot.lane.b32.xlu0 %v1079, 64
      %v1114 = vpop.permute.xlu0 %1113
      %1115 = vrot.lane.b32.xlu0 %v1080, 64
      %v1116 = vpop.permute.xlu0 %1115
      %1117 = vrot.lane.b32.xlu0 %v1081, 64
      %v1118 = vpop.permute.xlu0 %1117
      %1119 = vrot.lane.b32.xlu0 %v1082, 64
      %v1120 = vpop.permute.xlu0 %1119
      %1121 = vrot.lane.b32.xlu0 %v1083, 64
      %v1122 = vpop.permute.xlu0 %1121
      %1123 = vrot.lane.b32.xlu0 %v1084, 64
      %v1124 = vpop.permute.xlu0 %1123
      %1125 = vrot.lane.b32.xlu0 %v1085, 64
      %v1126 = vpop.permute.xlu0 %1125
      %1127 = vrot.lane.b32.xlu0 %v1086, 64
      %v1128 = vpop.permute.xlu0 %1127
      %1129 = vrot.lane.b32.xlu0 %v1087, 64
      %v1130 = vpop.permute.xlu0 %1129
      %1131 = vrot.lane.b32.xlu0 %v1088, 64
      %v1132 = vpop.permute.xlu0 %1131
      %1133 = vrot.lane.b32.xlu0 %v1089, 64
      %v1134 = vpop.permute.xlu0 %1133
      %1135 = vrot.lane.b32.xlu0 %v1090, 64
      %v1136 = vpop.permute.xlu0 %1135
      %1137 = vrot.lane.b32.xlu0 %v1091, 64
      %v1138 = vpop.permute.xlu0 %1137
      %1139 = vrot.lane.b32.xlu0 %v1092, 64
      %v1140 = vpop.permute.xlu0 %1139
      %v1157 = vmul.f32 %v1015, %v1110
      %v1158 = vmul.f32 %v1018, %v1112
      %v1159 = vmul.f32 %v1023, %v1114
      %v1160 = vmul.f32 %v1026, %v1116
      %v1161 = vmul.f32 %v1031, %v1118
      %v1162 = vmul.f32 %v1034, %v1120
      %v1163 = vmul.f32 %v1039, %v1122
      %v1164 = vmul.f32 %v1042, %v1124
      %v1165 = vmul.f32 %v1047, %v1126
      %v1166 = vmul.f32 %v1050, %v1128
      %v1167 = vmul.f32 %v1055, %v1130
      %v1168 = vmul.f32 %v1058, %v1132
      %v1169 = vmul.f32 %v1063, %v1134
      %v1170 = vmul.f32 %v1066, %v1136
      %v1171 = vmul.f32 %v1071, %v1138
      %v1172 = vmul.f32 %v1074, %v1140
      %1189 = vrot.lane.b32.xlu0 %v1157, 64
      %v1190 = vpop.permute.xlu0 %1189
      %1191 = vrot.lane.b32.xlu0 %v1158, 64
      %v1192 = vpop.permute.xlu0 %1191
      %1193 = vrot.lane.b32.xlu0 %v1159, 64
      %v1194 = vpop.permute.xlu0 %1193
      %1195 = vrot.lane.b32.xlu0 %v1160, 64
      %v1196 = vpop.permute.xlu0 %1195
      %1197 = vrot.lane.b32.xlu0 %v1161, 64
      %v1198 = vpop.permute.xlu0 %1197
      %1199 = vrot.lane.b32.xlu0 %v1162, 64
      %v1200 = vpop.permute.xlu0 %1199
      %1201 = vrot.lane.b32.xlu0 %v1163, 64
      %v1202 = vpop.permute.xlu0 %1201
      %1203 = vrot.lane.b32.xlu0 %v1164, 64
      %v1204 = vpop.permute.xlu0 %1203
      %1205 = vrot.lane.b32.xlu0 %v1165, 64
      %v1206 = vpop.permute.xlu0 %1205
      %1207 = vrot.lane.b32.xlu0 %v1166, 64
      %v1208 = vpop.permute.xlu0 %1207
      %1209 = vrot.lane.b32.xlu0 %v1167, 64
      %v1210 = vpop.permute.xlu0 %1209
      %1211 = vrot.lane.b32.xlu0 %v1168, 64
      %v1212 = vpop.permute.xlu0 %1211
      %1213 = vrot.lane.b32.xlu0 %v1169, 64
      %v1214 = vpop.permute.xlu0 %1213
      %1215 = vrot.lane.b32.xlu0 %v1170, 64
      %v1216 = vpop.permute.xlu0 %1215
      %1217 = vrot.lane.b32.xlu0 %v1171, 64
      %v1218 = vpop.permute.xlu0 %1217
      %1219 = vrot.lane.b32.xlu0 %v1172, 64
      %v1220 = vpop.permute.xlu0 %1219
      %v1237 = vadd.f32 %v1015, %v1190
      %v1238 = vadd.f32 %v1018, %v1192
      %v1239 = vadd.f32 %v1023, %v1194
      %v1240 = vadd.f32 %v1026, %v1196
      %v1241 = vadd.f32 %v1031, %v1198
      %v1242 = vadd.f32 %v1034, %v1200
      %v1243 = vadd.f32 %v1039, %v1202
      %v1244 = vadd.f32 %v1042, %v1204
      %v1245 = vadd.f32 %v1047, %v1206
      %v1246 = vadd.f32 %v1050, %v1208
      %v1247 = vadd.f32 %v1055, %v1210
      %v1248 = vadd.f32 %v1058, %v1212
      %v1249 = vadd.f32 %v1063, %v1214
      %v1250 = vadd.f32 %v1066, %v1216
      %v1251 = vadd.f32 %v1071, %v1218
      %v1252 = vadd.f32 %v1074, %v1220
      %v1253 = vpack.c.bf16 %v1238, %v1237
      %v1254 = vpack.c.bf16 %v1240, %v1239
      %v1255 = vpack.c.bf16 %v1242, %v1241
      %v1256 = vpack.c.bf16 %v1244, %v1243
      %v1257 = vpack.c.bf16 %v1246, %v1245
      %v1258 = vpack.c.bf16 %v1248, %v1247
      %v1259 = vpack.c.bf16 %v1250, %v1249
      %v1260 = vpack.c.bf16 %v1252, %v1251
      %v1261 = vld [vmem:[%s5] sm:$0xff]
      %v1262 = vld [vmem:[%s5 + $0x8] sm:$0xff]
      %v1263 = vld [vmem:[%s5 + $0x10] sm:$0xff]
      %v1264 = vld [vmem:[%s5 + $0x18] sm:$0xff]
      %v1265 = vld [vmem:[%s5 + $0x20] sm:$0xff]
      %v1266 = vld [vmem:[%s5 + $0x28] sm:$0xff]
      %v1267 = vld [vmem:[%s5 + $0x30] sm:$0xff]
      %v1268 = vld [vmem:[%s5 + $0x38] sm:$0xff]
      %v1269 = vld [vmem:[%s6] sm:$0x3]
      %v1271 = vlaneseq
      %v1272 = vshrl.u32 %v1271, 7
      %v1273 = vsub.s32 0, %v1272
      %v1274 = vrot.slane %v1269, %v1273
      %v1275 = vlaneseq
      %v1276 = vshrl.u32 %v1275, 7
      %v1277 = vsub.s32 1, %v1276
      %v1278 = vrot.slane %v1269, %v1277
      %v1289 = vunpack.c.l.b16 %v1261
      %v1290 = vunpack.c.h.b16 %v1261
      %v1291 = vunpack.c.l.b16 %v1262
      %v1292 = vunpack.c.h.b16 %v1262
      %v1293 = vunpack.c.l.b16 %v1263
      %v1294 = vunpack.c.h.b16 %v1263
      %v1295 = vunpack.c.l.b16 %v1264
      %v1296 = vunpack.c.h.b16 %v1264
      %v1297 = vunpack.c.l.b16 %v1265
      %v1298 = vunpack.c.h.b16 %v1265
      %v1299 = vunpack.c.l.b16 %v1266
      %v1300 = vunpack.c.h.b16 %v1266
      %v1301 = vunpack.c.l.b16 %v1267
      %v1302 = vunpack.c.h.b16 %v1267
      %v1303 = vunpack.c.l.b16 %v1268
      %v1304 = vunpack.c.h.b16 %v1268
      %v1305 = vpack.c.b16 %v1291, %v1289
      %v1306 = vpack.c.b16 %v1292, %v1290
      %v1307 = vpack.c.b16 %v1295, %v1293
      %v1308 = vpack.c.b16 %v1296, %v1294
      %v1309 = vpack.c.b16 %v1299, %v1297
      %v1310 = vpack.c.b16 %v1300, %v1298
      %v1311 = vpack.c.b16 %v1303, %v1301
      %v1312 = vpack.c.b16 %v1304, %v1302
      %vm1321 = vcmask 523264
      %v1323 = vsel %vm1321, %v1253, 0
      %v1326 = vsel %vm1321, %v1254, 0
      %v1329 = vsel %vm1321, %v1255, 0
      %v1332 = vsel %vm1321, %v1256, 0
      %v1335 = vsel %vm1321, %v1257, 0
      %v1338 = vsel %vm1321, %v1258, 0
      %v1341 = vsel %vm1321, %v1259, 0
      %v1344 = vsel %vm1321, %v1260, 0
      %1346 = vmatprep.subr.bf16.mxu0 %v1306
      %1347 = vmatpush1.bf16.msra.mxu0 %v1305
      %1348 = vmatprep.subr.bf16.mxu0 %v1308
      %1349 = vmatpush1.bf16.msra.mxu0 %v1307
      %1350 = vmatprep.subr.bf16.mxu0 %v1310
      %1351 = vmatpush1.bf16.msra.mxu0 %v1309
      %1352 = vmatprep.subr.bf16.mxu0 %v1312
      %1353 = vmatpush1.bf16.msra.mxu0 %v1311
      %1354 = vmatprep.subr.bf16.mxu0 0
      %1355 = vmatpush1.bf16.msra.mxu0 0
      %1356 = vmatprep.subr.bf16.mxu0 0
      %1357 = vmatpush1.bf16.msra.mxu0 0
      %1358 = vmatprep.subr.bf16.mxu0 0
      %1359 = vmatpush1.bf16.msra.mxu0 0
      %1360 = vmatprep.subr.bf16.mxu0 0
      %1361 = vmatpush1.bf16.msra.mxu0 0
      %1362 = vmatprep.subr.bf16.mxu0 0
      %1363 = vmatpush1.bf16.msra.mxu0 0
      %1364 = vmatprep.subr.bf16.mxu0 0
      %1365 = vmatpush1.bf16.msra.mxu0 0
      %1366 = vmatprep.subr.bf16.mxu0 0
      %1367 = vmatpush1.bf16.msra.mxu0 0
      %1368 = vmatprep.subr.bf16.mxu0 0
      %1369 = vmatpush1.bf16.msra.mxu0 0
      %1370 = vmatprep.subr.bf16.mxu0 0
      %1371 = vmatpush1.bf16.msra.mxu0 0
      %1372 = vmatprep.subr.bf16.mxu0 0
      %1373 = vmatpush1.bf16.msra.mxu0 0
      %1374 = vmatprep.subr.bf16.mxu0 0
      %1375 = vmatpush1.bf16.msra.mxu0 0
      %1376 = vmatprep.subr.bf16.mxu0 0
      %1377 = vmatpush1.bf16.msra.mxu0 0
      %1378 = vmatprep.mubr.bf16.mxu0 0
      %1379 = vmatmul.mubr.bf16.gmra.mrb[0].mxu0 %v1323
      %v1380 = vpop.f32.mrb[0].mxu0
      %v1381 = vadd.f32 %v1274, %v1380
      %v1382 = vpop.f32.mrb[0].mxu0
      %v1383 = vadd.f32 %v1278, %v1382
      %v1384 = vpop.f32.mrb[0].mxu0
      %v1385 = vadd.f32 %v1274, %v1384
      %v1386 = vpop.f32.mrb[0].mxu0
      %v1387 = vadd.f32 %v1278, %v1386
      %1388 = vmatprep.mubr.bf16.mxu0 0
      %1389 = vmatmul.mubr.bf16.gmra.mrb[0].mxu0 %v1326
      %v1390 = vpop.f32.mrb[0].mxu0
      %v1391 = vadd.f32 %v1274, %v1390
      %v1392 = vpop.f32.mrb[0].mxu0
      %v1393 = vadd.f32 %v1278, %v1392
      %v1394 = vpop.f32.mrb[0].mxu0
      %v1395 = vadd.f32 %v1274, %v1394
      %v1396 = vpop.f32.mrb[0].mxu0
      %v1397 = vadd.f32 %v1278, %v1396
      %1398 = vmatprep.mubr.bf16.mxu0 0
      %1399 = vmatmul.mubr.bf16.gmra.mrb[0].mxu0 %v1329
      %v1400 = vpop.f32.mrb[0].mxu0
      %v1401 = vadd.f32 %v1274, %v1400
      %v1402 = vpop.f32.mrb[0].mxu0
      %v1403 = vadd.f32 %v1278, %v1402
      %v1404 = vpop.f32.mrb[0].mxu0
      %v1405 = vadd.f32 %v1274, %v1404
      %v1406 = vpop.f32.mrb[0].mxu0
      %v1407 = vadd.f32 %v1278, %v1406
      %1408 = vmatprep.mubr.bf16.mxu0 0
      %1409 = vmatmul.mubr.bf16.gmra.mrb[0].mxu0 %v1332
      %v1410 = vpop.f32.mrb[0].mxu0
      %v1411 = vadd.f32 %v1274, %v1410
      %v1412 = vpop.f32.mrb[0].mxu0
      %v1413 = vadd.f32 %v1278, %v1412
      %v1414 = vpop.f32.mrb[0].mxu0
      %v1415 = vadd.f32 %v1274, %v1414
      %v1416 = vpop.f32.mrb[0].mxu0
      %v1417 = vadd.f32 %v1278, %v1416
      %1418 = vmatprep.mubr.bf16.mxu0 0
      %1419 = vmatmul.mubr.bf16.gmra.mrb[0].mxu0 %v1335
      %v1420 = vpop.f32.mrb[0].mxu0
      %v1421 = vadd.f32 %v1274, %v1420
      %v1422 = vpop.f32.mrb[0].mxu0
      %v1423 = vadd.f32 %v1278, %v1422
      %v1424 = vpop.f32.mrb[0].mxu0
      %v1425 = vadd.f32 %v1274, %v1424
      %v1426 = vpop.f32.mrb[0].mxu0
      %v1427 = vadd.f32 %v1278, %v1426
      %1428 = vmatprep.mubr.bf16.mxu0 0
      %1429 = vmatmul.mubr.bf16.gmra.mrb[0].mxu0 %v1338
      %v1430 = vpop.f32.mrb[0].mxu0
      %v1431 = vadd.f32 %v1274, %v1430
      %v1432 = vpop.f32.mrb[0].mxu0
      %v1433 = vadd.f32 %v1278, %v1432
      %v1434 = vpop.f32.mrb[0].mxu0
      %v1435 = vadd.f32 %v1274, %v1434
      %v1436 = vpop.f32.mrb[0].mxu0
      %v1437 = vadd.f32 %v1278, %v1436
      %1438 = vmatprep.mubr.bf16.mxu0 0
      %1439 = vmatmul.mubr.bf16.gmra.mrb[0].mxu0 %v1341
      %v1440 = vpop.f32.mrb[0].mxu0
      %v1441 = vadd.f32 %v1274, %v1440
      %v1442 = vpop.f32.mrb[0].mxu0
      %v1443 = vadd.f32 %v1278, %v1442
      %v1444 = vpop.f32.mrb[0].mxu0
      %v1445 = vadd.f32 %v1274, %v1444
      %v1446 = vpop.f32.mrb[0].mxu0
      %v1447 = vadd.f32 %v1278, %v1446
      %1448 = vmatprep.mubr.bf16.mxu0 0
      %1449 = vmatmul.mubr.bf16.gmra.mrb[0].mxu0 %v1344
      %v1450 = vpop.f32.mrb[0].mxu0
      %v1451 = vadd.f32 %v1274, %v1450
      %v1452 = vpop.f32.mrb[0].mxu0
      %v1453 = vadd.f32 %v1278, %v1452
      %v1454 = vpop.f32.mrb[0].mxu0
      %v1455 = vadd.f32 %v1274, %v1454
      %v1456 = vpop.f32.mrb[0].mxu0
      %v1457 = vadd.f32 %v1278, %v1456
      %1458 = vdwg.mxu0
      %v1459 = vmax.f32 %v1381, 0.0
      %v1460 = vmax.f32 %v1383, 0.0
      %v1461 = vmax.f32 %v1385, 0.0
      %v1462 = vmax.f32 %v1387, 0.0
      %v1463 = vmax.f32 %v1391, 0.0
      %v1464 = vmax.f32 %v1393, 0.0
      %v1465 = vmax.f32 %v1395, 0.0
      %v1466 = vmax.f32 %v1397, 0.0
      %v1467 = vmax.f32 %v1401, 0.0
      %v1468 = vmax.f32 %v1403, 0.0
      %v1469 = vmax.f32 %v1405, 0.0
      %v1470 = vmax.f32 %v1407, 0.0
      %v1471 = vmax.f32 %v1411, 0.0
      %v1472 = vmax.f32 %v1413, 0.0
      %v1473 = vmax.f32 %v1415, 0.0
      %v1474 = vmax.f32 %v1417, 0.0
      %v1475 = vmax.f32 %v1421, 0.0
      %v1476 = vmax.f32 %v1423, 0.0
      %v1477 = vmax.f32 %v1425, 0.0
      %v1478 = vmax.f32 %v1427, 0.0
      %v1479 = vmax.f32 %v1431, 0.0
      %v1480 = vmax.f32 %v1433, 0.0
      %v1481 = vmax.f32 %v1435, 0.0
      %v1482 = vmax.f32 %v1437, 0.0
      %v1483 = vmax.f32 %v1441, 0.0
      %v1484 = vmax.f32 %v1443, 0.0
      %v1485 = vmax.f32 %v1445, 0.0
      %v1486 = vmax.f32 %v1447, 0.0
      %v1487 = vmax.f32 %v1451, 0.0
      %v1488 = vmax.f32 %v1453, 0.0
      %v1489 = vmax.f32 %v1455, 0.0
      %v1490 = vmax.f32 %v1457, 0.0
      %v1491 = vpack.c.bf16 %v1461, %v1459
      %v1492 = vpack.c.bf16 %v1462, %v1460
      %v1493 = vpack.c.bf16 %v1465, %v1463
      %v1494 = vpack.c.bf16 %v1466, %v1464
      %v1495 = vpack.c.bf16 %v1469, %v1467
      %v1496 = vpack.c.bf16 %v1470, %v1468
      %v1497 = vpack.c.bf16 %v1473, %v1471
      %v1498 = vpack.c.bf16 %v1474, %v1472
      %v1499 = vpack.c.bf16 %v1477, %v1475
      %v1500 = vpack.c.bf16 %v1478, %v1476
      %v1501 = vpack.c.bf16 %v1481, %v1479
      %v1502 = vpack.c.bf16 %v1482, %v1480
      %v1503 = vpack.c.bf16 %v1485, %v1483
      %v1504 = vpack.c.bf16 %v1486, %v1484
      %v1505 = vpack.c.bf16 %v1489, %v1487
      %v1506 = vpack.c.bf16 %v1490, %v1488
      %v1507 = vld [vmem:[%s7] sm:$0xff]
      %v1508 = vld [vmem:[%s7 + $0x8] sm:$0xff]
      %v1509 = vld [vmem:[%s7 + $0x10] sm:$0xff]
      %v1510 = vld [vmem:[%s7 + $0x18] sm:$0xff]
      %v1511 = vld [vmem:[%s7 + $0x20] sm:$0xff]
      %v1512 = vld [vmem:[%s7 + $0x28] sm:$0xff]
      %v1513 = vld [vmem:[%s7 + $0x30] sm:$0xff]
      %v1514 = vld [vmem:[%s7 + $0x38] sm:$0xff]
      %v1515 = vld [vmem:[%s7 + $0x40] sm:$0xff]
      %v1516 = vld [vmem:[%s7 + $0x48] sm:$0xff]
      %v1517 = vld [vmem:[%s7 + $0x50] sm:$0xff]
      %v1518 = vld [vmem:[%s7 + $0x58] sm:$0xff]
      %v1519 = vld [vmem:[%s7 + $0x60] sm:$0xff]
      %v1520 = vld [vmem:[%s7 + $0x68] sm:$0xff]
      %v1521 = vld [vmem:[%s7 + $0x70] sm:$0xff]
      %v1522 = vld [vmem:[%s7 + $0x78] sm:$0xff]
      %v1523 = vld [vmem:[%s7 + $0x80] sm:$0xff]
      %v1524 = vld [vmem:[%s7 + $0x88] sm:$0xff]
      %v1525 = vld [vmem:[%s7 + $0x90] sm:$0xff]
      %v1526 = vld [vmem:[%s7 + $0x98] sm:$0xff]
      %v1527 = vld [vmem:[%s7 + $0xa0] sm:$0xff]
      %v1528 = vld [vmem:[%s7 + $0xa8] sm:$0xff]
      %v1529 = vld [vmem:[%s7 + $0xb0] sm:$0xff]
      %v1530 = vld [vmem:[%s7 + $0xb8] sm:$0xff]
      %v1531 = vld [vmem:[%s7 + $0xc0] sm:$0xff]
      %v1532 = vld [vmem:[%s7 + $0xc8] sm:$0xff]
      %v1533 = vld [vmem:[%s7 + $0xd0] sm:$0xff]
      %v1534 = vld [vmem:[%s7 + $0xd8] sm:$0xff]
      %v1535 = vld [vmem:[%s7 + $0xe0] sm:$0xff]
      %v1536 = vld [vmem:[%s7 + $0xe8] sm:$0xff]
      %v1537 = vld [vmem:[%s7 + $0xf0] sm:$0xff]
      %v1538 = vld [vmem:[%s7 + $0xf8] sm:$0xff]
      %v1539 = vld [vmem:[%s8] sm:$0x3]
      %v1541 = vlaneseq
      %v1542 = vshrl.u32 %v1541, 7
      %v1543 = vsub.s32 0, %v1542
      %v1544 = vrot.slane %v1539, %v1543
      %v1545 = vlaneseq
      %v1546 = vshrl.u32 %v1545, 7
      %v1547 = vsub.s32 1, %v1546
      %v1548 = vrot.slane %v1539, %v1547
      %v1583 = vunpack.c.l.b16 %v1507
      %v1584 = vunpack.c.h.b16 %v1507
      %v1585 = vunpack.c.l.b16 %v1508
      %v1586 = vunpack.c.h.b16 %v1508
      %v1587 = vunpack.c.l.b16 %v1509
      %v1588 = vunpack.c.h.b16 %v1509
      %v1589 = vunpack.c.l.b16 %v1510
      %v1590 = vunpack.c.h.b16 %v1510
      %v1591 = vunpack.c.l.b16 %v1511
      %v1592 = vunpack.c.h.b16 %v1511
      %v1593 = vunpack.c.l.b16 %v1512
      %v1594 = vunpack.c.h.b16 %v1512
      %v1595 = vunpack.c.l.b16 %v1513
      %v1596 = vunpack.c.h.b16 %v1513
      %v1597 = vunpack.c.l.b16 %v1514
      %v1598 = vunpack.c.h.b16 %v1514
      %v1599 = vunpack.c.l.b16 %v1515
      %v1600 = vunpack.c.h.b16 %v1515
      %v1601 = vunpack.c.l.b16 %v1516
      %v1602 = vunpack.c.h.b16 %v1516
      %v1603 = vunpack.c.l.b16 %v1517
      %v1604 = vunpack.c.h.b16 %v1517
      %v1605 = vunpack.c.l.b16 %v1518
      %v1606 = vunpack.c.h.b16 %v1518
      %v1607 = vunpack.c.l.b16 %v1519
      %v1608 = vunpack.c.h.b16 %v1519
      %v1609 = vunpack.c.l.b16 %v1520
      %v1610 = vunpack.c.h.b16 %v1520
      %v1611 = vunpack.c.l.b16 %v1521
      %v1612 = vunpack.c.h.b16 %v1521
      %v1613 = vunpack.c.l.b16 %v1522
      %v1614 = vunpack.c.h.b16 %v1522
      %v1615 = vunpack.c.l.b16 %v1523
      %v1616 = vunpack.c.h.b16 %v1523
      %v1617 = vunpack.c.l.b16 %v1524
      %v1618 = vunpack.c.h.b16 %v1524
      %v1619 = vunpack.c.l.b16 %v1525
      %v1620 = vunpack.c.h.b16 %v1525
      %v1621 = vunpack.c.l.b16 %v1526
      %v1622 = vunpack.c.h.b16 %v1526
      %v1623 = vunpack.c.l.b16 %v1527
      %v1624 = vunpack.c.h.b16 %v1527
      %v1625 = vunpack.c.l.b16 %v1528
      %v1626 = vunpack.c.h.b16 %v1528
      %v1627 = vunpack.c.l.b16 %v1529
      %v1628 = vunpack.c.h.b16 %v1529
      %v1629 = vunpack.c.l.b16 %v1530
      %v1630 = vunpack.c.h.b16 %v1530
      %v1631 = vunpack.c.l.b16 %v1531
      %v1632 = vunpack.c.h.b16 %v1531
      %v1633 = vunpack.c.l.b16 %v1532
      %v1634 = vunpack.c.h.b16 %v1532
      %v1635 = vunpack.c.l.b16 %v1533
      %v1636 = vunpack.c.h.b16 %v1533
      %v1637 = vunpack.c.l.b16 %v1534
      %v1638 = vunpack.c.h.b16 %v1534
      %v1639 = vunpack.c.l.b16 %v1535
      %v1640 = vunpack.c.h.b16 %v1535
      %v1641 = vunpack.c.l.b16 %v1536
      %v1642 = vunpack.c.h.b16 %v1536
      %v1643 = vunpack.c.l.b16 %v1537
      %v1644 = vunpack.c.h.b16 %v1537
      %v1645 = vunpack.c.l.b16 %v1538
      %v1646 = vunpack.c.h.b16 %v1538
      %v1647 = vpack.c.b16 %v1585, %v1583
      %v1648 = vpack.c.b16 %v1586, %v1584
      %v1649 = vpack.c.b16 %v1589, %v1587
      %v1650 = vpack.c.b16 %v1590, %v1588
      %v1651 = vpack.c.b16 %v1593, %v1591
      %v1652 = vpack.c.b16 %v1594, %v1592
      %v1653 = vpack.c.b16 %v1597, %v1595
      %v1654 = vpack.c.b16 %v1598, %v1596
      %v1655 = vpack.c.b16 %v1601, %v1599
      %v1656 = vpack.c.b16 %v1602, %v1600
      %v1657 = vpack.c.b16 %v1605, %v1603
      %v1658 = vpack.c.b16 %v1606, %v1604
      %v1659 = vpack.c.b16 %v1609, %v1607
      %v1660 = vpack.c.b16 %v1610, %v1608
      %v1661 = vpack.c.b16 %v1613, %v1611
      %v1662 = vpack.c.b16 %v1614, %v1612
      %v1663 = vpack.c.b16 %v1617, %v1615
      %v1664 = vpack.c.b16 %v1618, %v1616
      %v1665 = vpack.c.b16 %v1621, %v1619
      %v1666 = vpack.c.b16 %v1622, %v1620
      %v1667 = vpack.c.b16 %v1625, %v1623
      %v1668 = vpack.c.b16 %v1626, %v1624
      %v1669 = vpack.c.b16 %v1629, %v1627
      %v1670 = vpack.c.b16 %v1630, %v1628
      %v1671 = vpack.c.b16 %v1633, %v1631
      %v1672 = vpack.c.b16 %v1634, %v1632
      %v1673 = vpack.c.b16 %v1637, %v1635
      %v1674 = vpack.c.b16 %v1638, %v1636
      %v1675 = vpack.c.b16 %v1641, %v1639
      %v1676 = vpack.c.b16 %v1642, %v1640
      %v1677 = vpack.c.b16 %v1645, %v1643
      %v1678 = vpack.c.b16 %v1646, %v1644
      %1711 = vmatprep.subr.bf16.mxu0 %v1648
      %1712 = vmatpush1.bf16.msra.mxu0 %v1647
      %1713 = vmatprep.subr.bf16.mxu0 %v1650
      %1714 = vmatpush1.bf16.msra.mxu0 %v1649
      %1715 = vmatprep.subr.bf16.mxu0 %v1652
      %1716 = vmatpush1.bf16.msra.mxu0 %v1651
      %1717 = vmatprep.subr.bf16.mxu0 %v1654
      %1718 = vmatpush1.bf16.msra.mxu0 %v1653
      %1719 = vmatprep.subr.bf16.mxu0 %v1656
      %1720 = vmatpush1.bf16.msra.mxu0 %v1655
      %1721 = vmatprep.subr.bf16.mxu0 %v1658
      %1722 = vmatpush1.bf16.msra.mxu0 %v1657
      %1723 = vmatprep.subr.bf16.mxu0 %v1660
      %1724 = vmatpush1.bf16.msra.mxu0 %v1659
      %1725 = vmatprep.subr.bf16.mxu0 %v1662
      %1726 = vmatpush1.bf16.msra.mxu0 %v1661
      %1727 = vmatprep.subr.bf16.mxu0 %v1664
      %1728 = vmatpush1.bf16.msra.mxu0 %v1663
      %1729 = vmatprep.subr.bf16.mxu0 %v1666
      %1730 = vmatpush1.bf16.msra.mxu0 %v1665
      %1731 = vmatprep.subr.bf16.mxu0 %v1668
      %1732 = vmatpush1.bf16.msra.mxu0 %v1667
      %1733 = vmatprep.subr.bf16.mxu0 %v1670
      %1734 = vmatpush1.bf16.msra.mxu0 %v1669
      %1735 = vmatprep.subr.bf16.mxu0 %v1672
      %1736 = vmatpush1.bf16.msra.mxu0 %v1671
      %1737 = vmatprep.subr.bf16.mxu0 %v1674
      %1738 = vmatpush1.bf16.msra.mxu0 %v1673
      %1739 = vmatprep.subr.bf16.mxu0 %v1676
      %1740 = vmatpush1.bf16.msra.mxu0 %v1675
      %1741 = vmatprep.subr.bf16.mxu0 %v1678
      %1742 = vmatpush1.bf16.msra.mxu0 %v1677
      %1743 = vmatprep.mubr.bf16.mxu0 %v1492
      %1744 = vmatmul.mubr.bf16.gmra.mrb[0].mxu0 %v1491
      %v1745 = vpop.f32.mrb[0].mxu0
      %v1746 = vadd.f32 %v1544, %v1745
      %v1747 = vpop.f32.mrb[0].mxu0
      %v1748 = vadd.f32 %v1548, %v1747
      %v1749 = vpop.f32.mrb[0].mxu0
      %v1750 = vadd.f32 %v1544, %v1749
      %v1751 = vpop.f32.mrb[0].mxu0
      %v1752 = vadd.f32 %v1548, %v1751
      %1753 = vmatprep.mubr.bf16.mxu0 %v1494
      %1754 = vmatmul.mubr.bf16.gmra.mrb[0].mxu0 %v1493
      %v1755 = vpop.f32.mrb[0].mxu0
      %v1756 = vadd.f32 %v1544, %v1755
      %v1757 = vpop.f32.mrb[0].mxu0
      %v1758 = vadd.f32 %v1548, %v1757
      %v1759 = vpop.f32.mrb[0].mxu0
      %v1760 = vadd.f32 %v1544, %v1759
      %v1761 = vpop.f32.mrb[0].mxu0
      %v1762 = vadd.f32 %v1548, %v1761
      %1763 = vmatprep.mubr.bf16.mxu0 %v1496
      %1764 = vmatmul.mubr.bf16.gmra.mrb[0].mxu0 %v1495
      %v1765 = vpop.f32.mrb[0].mxu0
      %v1766 = vadd.f32 %v1544, %v1765
      %v1767 = vpop.f32.mrb[0].mxu0
      %v1768 = vadd.f32 %v1548, %v1767
      %v1769 = vpop.f32.mrb[0].mxu0
      %v1770 = vadd.f32 %v1544, %v1769
      %v1771 = vpop.f32.mrb[0].mxu0
      %v1772 = vadd.f32 %v1548, %v1771
      %1773 = vmatprep.mubr.bf16.mxu0 %v1498
      %1774 = vmatmul.mubr.bf16.gmra.mrb[0].mxu0 %v1497
      %v1775 = vpop.f32.mrb[0].mxu0
      %v1776 = vadd.f32 %v1544, %v1775
      %v1777 = vpop.f32.mrb[0].mxu0
      %v1778 = vadd.f32 %v1548, %v1777
      %v1779 = vpop.f32.mrb[0].mxu0
      %v1780 = vadd.f32 %v1544, %v1779
      %v1781 = vpop.f32.mrb[0].mxu0
      %v1782 = vadd.f32 %v1548, %v1781
      %1783 = vmatprep.mubr.bf16.mxu0 %v1500
      %1784 = vmatmul.mubr.bf16.gmra.mrb[0].mxu0 %v1499
      %v1785 = vpop.f32.mrb[0].mxu0
      %v1786 = vadd.f32 %v1544, %v1785
      %v1787 = vpop.f32.mrb[0].mxu0
      %v1788 = vadd.f32 %v1548, %v1787
      %v1789 = vpop.f32.mrb[0].mxu0
      %v1790 = vadd.f32 %v1544, %v1789
      %v1791 = vpop.f32.mrb[0].mxu0
      %v1792 = vadd.f32 %v1548, %v1791
      %1793 = vmatprep.mubr.bf16.mxu0 %v1502
      %1794 = vmatmul.mubr.bf16.gmra.mrb[0].mxu0 %v1501
      %v1795 = vpop.f32.mrb[0].mxu0
      %v1796 = vadd.f32 %v1544, %v1795
      %v1797 = vpop.f32.mrb[0].mxu0
      %v1798 = vadd.f32 %v1548, %v1797
      %v1799 = vpop.f32.mrb[0].mxu0
      %v1800 = vadd.f32 %v1544, %v1799
      %v1801 = vpop.f32.mrb[0].mxu0
      %v1802 = vadd.f32 %v1548, %v1801
      %1803 = vmatprep.mubr.bf16.mxu0 %v1504
      %1804 = vmatmul.mubr.bf16.gmra.mrb[0].mxu0 %v1503
      %v1805 = vpop.f32.mrb[0].mxu0
      %v1806 = vadd.f32 %v1544, %v1805
      %v1807 = vpop.f32.mrb[0].mxu0
      %v1808 = vadd.f32 %v1548, %v1807
      %v1809 = vpop.f32.mrb[0].mxu0
      %v1810 = vadd.f32 %v1544, %v1809
      %v1811 = vpop.f32.mrb[0].mxu0
      %v1812 = vadd.f32 %v1548, %v1811
      %1813 = vmatprep.mubr.bf16.mxu0 %v1506
      %1814 = vmatmul.mubr.bf16.gmra.mrb[0].mxu0 %v1505
      %v1815 = vpop.f32.mrb[0].mxu0
      %v1816 = vadd.f32 %v1544, %v1815
      %v1817 = vpop.f32.mrb[0].mxu0
      %v1818 = vadd.f32 %v1548, %v1817
      %v1819 = vpop.f32.mrb[0].mxu0
      %v1820 = vadd.f32 %v1544, %v1819
      %v1821 = vpop.f32.mrb[0].mxu0
      %v1822 = vadd.f32 %v1548, %v1821
      %1823 = vdwg.mxu0
      %v1824 = vxor.u32 %v1746, 2147483648
      %v1825 = vxor.u32 %v1748, 2147483648
      %v1826 = vxor.u32 %v1750, 2147483648
      %v1827 = vxor.u32 %v1752, 2147483648
      %v1828 = vxor.u32 %v1756, 2147483648
      %v1829 = vxor.u32 %v1758, 2147483648
      %v1830 = vxor.u32 %v1760, 2147483648
      %v1831 = vxor.u32 %v1762, 2147483648
      %v1832 = vxor.u32 %v1766, 2147483648
      %v1833 = vxor.u32 %v1768, 2147483648
      %v1834 = vxor.u32 %v1770, 2147483648
      %v1835 = vxor.u32 %v1772, 2147483648
      %v1836 = vxor.u32 %v1776, 2147483648
      %v1837 = vxor.u32 %v1778, 2147483648
      %v1838 = vxor.u32 %v1780, 2147483648
      %v1839 = vxor.u32 %v1782, 2147483648
      %v1840 = vxor.u32 %v1786, 2147483648
      %v1841 = vxor.u32 %v1788, 2147483648
      %v1842 = vxor.u32 %v1790, 2147483648
      %v1843 = vxor.u32 %v1792, 2147483648
      %v1844 = vxor.u32 %v1796, 2147483648
      %v1845 = vxor.u32 %v1798, 2147483648
      %v1846 = vxor.u32 %v1800, 2147483648
      %v1847 = vxor.u32 %v1802, 2147483648
      %v1848 = vxor.u32 %v1806, 2147483648
      %v1849 = vxor.u32 %v1808, 2147483648
      %v1850 = vxor.u32 %v1810, 2147483648
      %v1851 = vxor.u32 %v1812, 2147483648
      %v1852 = vxor.u32 %v1816, 2147483648
      %v1853 = vxor.u32 %v1818, 2147483648
      %v1854 = vxor.u32 %v1820, 2147483648
      %v1855 = vxor.u32 %v1822, 2147483648
      %v1856 = vmul.f32 %v1824, 1.442695
      %v1857 = vpow.pop %v1856
      %v1858 = vmul.f32 %v1825, 1.442695
      %v1859 = vpow.pop %v1858
      %v1860 = vmul.f32 %v1826, 1.442695
      %v1861 = vpow.pop %v1860
      %v1862 = vmul.f32 %v1827, 1.442695
      %v1863 = vpow.pop %v1862
      %v1864 = vmul.f32 %v1828, 1.442695
      %v1865 = vpow.pop %v1864
      %v1866 = vmul.f32 %v1829, 1.442695
      %v1867 = vpow.pop %v1866
      %v1868 = vmul.f32 %v1830, 1.442695
      %v1869 = vpow.pop %v1868
      %v1870 = vmul.f32 %v1831, 1.442695
      %v1871 = vpow.pop %v1870
      %v1872 = vmul.f32 %v1832, 1.442695
      %v1873 = vpow.pop %v1872
      %v1874 = vmul.f32 %v1833, 1.442695
      %v1875 = vpow.pop %v1874
      %v1876 = vmul.f32 %v1834, 1.442695
      %v1877 = vpow.pop %v1876
      %v1878 = vmul.f32 %v1835, 1.442695
      %v1879 = vpow.pop %v1878
      %v1880 = vmul.f32 %v1836, 1.442695
      %v1881 = vpow.pop %v1880
      %v1882 = vmul.f32 %v1837, 1.442695
      %v1883 = vpow.pop %v1882
      %v1884 = vmul.f32 %v1838, 1.442695
      %v1885 = vpow.pop %v1884
      %v1886 = vmul.f32 %v1839, 1.442695
      %v1887 = vpow.pop %v1886
      %v1888 = vmul.f32 %v1840, 1.442695
      %v1889 = vpow.pop %v1888
      %v1890 = vmul.f32 %v1841, 1.442695
      %v1891 = vpow.pop %v1890
      %v1892 = vmul.f32 %v1842, 1.442695
      %v1893 = vpow.pop %v1892
      %v1894 = vmul.f32 %v1843, 1.442695
      %v1895 = vpow.pop %v1894
      %v1896 = vmul.f32 %v1844, 1.442695
      %v1897 = vpow.pop %v1896
      %v1898 = vmul.f32 %v1845, 1.442695
      %v1899 = vpow.pop %v1898
      %v1900 = vmul.f32 %v1846, 1.442695
      %v1901 = vpow.pop %v1900
      %v1902 = vmul.f32 %v1847, 1.442695
      %v1903 = vpow.pop %v1902
      %v1904 = vmul.f32 %v1848, 1.442695
      %v1905 = vpow.pop %v1904
      %v1906 = vmul.f32 %v1849, 1.442695
      %v1907 = vpow.pop %v1906
      %v1908 = vmul.f32 %v1850, 1.442695
      %v1909 = vpow.pop %v1908
      %v1910 = vmul.f32 %v1851, 1.442695
      %v1911 = vpow.pop %v1910
      %v1912 = vmul.f32 %v1852, 1.442695
      %v1913 = vpow.pop %v1912
      %v1914 = vmul.f32 %v1853, 1.442695
      %v1915 = vpow.pop %v1914
      %v1916 = vmul.f32 %v1854, 1.442695
      %v1917 = vpow.pop %v1916
      %v1918 = vmul.f32 %v1855, 1.442695
      %v1919 = vpow.pop %v1918
      %v1920 = vadd.f32 %v1857, 1.0
      %v1921 = vadd.f32 %v1859, 1.0
      %v1922 = vadd.f32 %v1861, 1.0
      %v1923 = vadd.f32 %v1863, 1.0
      %v1924 = vadd.f32 %v1865, 1.0
      %v1925 = vadd.f32 %v1867, 1.0
      %v1926 = vadd.f32 %v1869, 1.0
      %v1927 = vadd.f32 %v1871, 1.0
      %v1928 = vadd.f32 %v1873, 1.0
      %v1929 = vadd.f32 %v1875, 1.0
      %v1930 = vadd.f32 %v1877, 1.0
      %v1931 = vadd.f32 %v1879, 1.0
      %v1932 = vadd.f32 %v1881, 1.0
      %v1933 = vadd.f32 %v1883, 1.0
      %v1934 = vadd.f32 %v1885, 1.0
      %v1935 = vadd.f32 %v1887, 1.0
      %v1936 = vadd.f32 %v1889, 1.0
      %v1937 = vadd.f32 %v1891, 1.0
      %v1938 = vadd.f32 %v1893, 1.0
      %v1939 = vadd.f32 %v1895, 1.0
      %v1940 = vadd.f32 %v1897, 1.0
      %v1941 = vadd.f32 %v1899, 1.0
      %v1942 = vadd.f32 %v1901, 1.0
      %v1943 = vadd.f32 %v1903, 1.0
      %v1944 = vadd.f32 %v1905, 1.0
      %v1945 = vadd.f32 %v1907, 1.0
      %v1946 = vadd.f32 %v1909, 1.0
      %v1947 = vadd.f32 %v1911, 1.0
      %v1948 = vadd.f32 %v1913, 1.0
      %v1949 = vadd.f32 %v1915, 1.0
      %v1950 = vadd.f32 %v1917, 1.0
      %v1951 = vadd.f32 %v1919, 1.0
      %v1952 = vrcp.pop %v1920
      %v1953 = vmul.f32 1.0, %v1952
      %v1954 = vrcp.pop %v1921
      %v1955 = vmul.f32 1.0, %v1954
      %v1956 = vrcp.pop %v1922
      %v1957 = vmul.f32 1.0, %v1956
      %v1958 = vrcp.pop %v1923
      %v1959 = vmul.f32 1.0, %v1958
      %v1960 = vrcp.pop %v1924
      %v1961 = vmul.f32 1.0, %v1960
      %v1962 = vrcp.pop %v1925
      %v1963 = vmul.f32 1.0, %v1962
      %v1964 = vrcp.pop %v1926
      %v1965 = vmul.f32 1.0, %v1964
      %v1966 = vrcp.pop %v1927
      %v1967 = vmul.f32 1.0, %v1966
      %v1968 = vrcp.pop %v1928
      %v1969 = vmul.f32 1.0, %v1968
      %v1970 = vrcp.pop %v1929
      %v1971 = vmul.f32 1.0, %v1970
      %v1972 = vrcp.pop %v1930
      %v1973 = vmul.f32 1.0, %v1972
      %v1974 = vrcp.pop %v1931
      %v1975 = vmul.f32 1.0, %v1974
      %v1976 = vrcp.pop %v1932
      %v1977 = vmul.f32 1.0, %v1976
      %v1978 = vrcp.pop %v1933
      %v1979 = vmul.f32 1.0, %v1978
      %v1980 = vrcp.pop %v1934
      %v1981 = vmul.f32 1.0, %v1980
      %v1982 = vrcp.pop %v1935
      %v1983 = vmul.f32 1.0, %v1982
      %v1984 = vrcp.pop %v1936
      %v1985 = vmul.f32 1.0, %v1984
      %v1986 = vrcp.pop %v1937
      %v1987 = vmul.f32 1.0, %v1986
      %v1988 = vrcp.pop %v1938
      %v1989 = vmul.f32 1.0, %v1988
      %v1990 = vrcp.pop %v1939
      %v1991 = vmul.f32 1.0, %v1990
      %v1992 = vrcp.pop %v1940
      %v1993 = vmul.f32 1.0, %v1992
      %v1994 = vrcp.pop %v1941
      %v1995 = vmul.f32 1.0, %v1994
      %v1996 = vrcp.pop %v1942
      %v1997 = vmul.f32 1.0, %v1996
      %v1998 = vrcp.pop %v1943
      %v1999 = vmul.f32 1.0, %v1998
      %v2000 = vrcp.pop %v1944
      %v2001 = vmul.f32 1.0, %v2000
      %v2002 = vrcp.pop %v1945
      %v2003 = vmul.f32 1.0, %v2002
      %v2004 = vrcp.pop %v1946
      %v2005 = vmul.f32 1.0, %v2004
      %v2006 = vrcp.pop %v1947
      %v2007 = vmul.f32 1.0, %v2006
      %v2008 = vrcp.pop %v1948
      %v2009 = vmul.f32 1.0, %v2008
      %v2010 = vrcp.pop %v1949
      %v2011 = vmul.f32 1.0, %v2010
      %v2012 = vrcp.pop %v1950
      %v2013 = vmul.f32 1.0, %v2012
      %v2014 = vrcp.pop %v1951
      %v2015 = vmul.f32 1.0, %v2014
      %2016 = vst [vmem:[%s423] sm:$0xff] %v1953
      %2017 = vst [vmem:[%s423 + $0x8] sm:$0xff] %v1955
      %2018 = vst [vmem:[%s423 + $0x10] sm:$0xff] %v1957
      %2019 = vst [vmem:[%s423 + $0x18] sm:$0xff] %v1959
      %2020 = vst [vmem:[%s423 + $0x20] sm:$0xff] %v1961
      %2021 = vst [vmem:[%s423 + $0x28] sm:$0xff] %v1963
      %2022 = vst [vmem:[%s423 + $0x30] sm:$0xff] %v1965
      %2023 = vst [vmem:[%s423 + $0x38] sm:$0xff] %v1967
      %2024 = vst [vmem:[%s423 + $0x40] sm:$0xff] %v1969
      %2025 = vst [vmem:[%s423 + $0x48] sm:$0xff] %v1971
      %2026 = vst [vmem:[%s423 + $0x50] sm:$0xff] %v1973
      %2027 = vst [vmem:[%s423 + $0x58] sm:$0xff] %v1975
      %2028 = vst [vmem:[%s423 + $0x60] sm:$0xff] %v1977
      %2029 = vst [vmem:[%s423 + $0x68] sm:$0xff] %v1979
      %2030 = vst [vmem:[%s423 + $0x70] sm:$0xff] %v1981
      %2031 = vst [vmem:[%s423 + $0x78] sm:$0xff] %v1983
      %2032 = vst [vmem:[%s423 + $0x80] sm:$0xff] %v1985
      %2033 = vst [vmem:[%s423 + $0x88] sm:$0xff] %v1987
      %2034 = vst [vmem:[%s423 + $0x90] sm:$0xff] %v1989
      %2035 = vst [vmem:[%s423 + $0x98] sm:$0xff] %v1991
      %2036 = vst [vmem:[%s423 + $0xa0] sm:$0xff] %v1993
      %2037 = vst [vmem:[%s423 + $0xa8] sm:$0xff] %v1995
      %2038 = vst [vmem:[%s423 + $0xb0] sm:$0xff] %v1997
      %2039 = vst [vmem:[%s423 + $0xb8] sm:$0xff] %v1999
      %2040 = vst [vmem:[%s423 + $0xc0] sm:$0xff] %v2001
      %2041 = vst [vmem:[%s423 + $0xc8] sm:$0xff] %v2003
      %2042 = vst [vmem:[%s423 + $0xd0] sm:$0xff] %v2005
      %2043 = vst [vmem:[%s423 + $0xd8] sm:$0xff] %v2007
      %2044 = vst [vmem:[%s423 + $0xe0] sm:$0xff] %v2009
      %2045 = vst [vmem:[%s423 + $0xe8] sm:$0xff] %v2011
      %2046 = vst [vmem:[%s423 + $0xf0] sm:$0xff] %v2013
      %2047 = vst [vmem:[%s423 + $0xf8] sm:$0xff] %v2015
      %2048 = vst [vmem:[%s429] sm:$0xff] %v1015
      %2049 = vst [vmem:[%s429 + $0x8] sm:$0xff] %v1018
      %2050 = vst [vmem:[%s429 + $0x10] sm:$0xff] %v1023
      %2051 = vst [vmem:[%s429 + $0x18] sm:$0xff] %v1026
      %2052 = vst [vmem:[%s429 + $0x20] sm:$0xff] %v1031
      %2053 = vst [vmem:[%s429 + $0x28] sm:$0xff] %v1034
      %2054 = vst [vmem:[%s429 + $0x30] sm:$0xff] %v1039
      %2055 = vst [vmem:[%s429 + $0x38] sm:$0xff] %v1042
      %2056 = vst [vmem:[%s429 + $0x40] sm:$0xff] %v1047
      %2057 = vst [vmem:[%s429 + $0x48] sm:$0xff] %v1050
      %2058 = vst [vmem:[%s429 + $0x50] sm:$0xff] %v1055
      %2059 = vst [vmem:[%s429 + $0x58] sm:$0xff] %v1058
      %2060 = vst [vmem:[%s429 + $0x60] sm:$0xff] %v1063
      %2061 = vst [vmem:[%s429 + $0x68] sm:$0xff] %v1066
      %2062 = vst [vmem:[%s429 + $0x70] sm:$0xff] %v1071
      %2063 = vst [vmem:[%s429 + $0x78] sm:$0xff] %v1074
      %s2064 = smul.u32 16, %s23
      %p2065 = scmp.lt.s32.totalorder %s2064, 47
      %s2066 = scalar_select %p2065, %s2064, 47
      %s2067 = smul.addr %s2066, 2
      %s2068 = smul.addr %s2067, 8
      %s2069 = scalar_lea.vmem %s10, %s2068
      %s2070 = smul.u32 16, %s23
      %p2071 = scmp.lt.s32.totalorder %s2070, 47
      %s2072 = scalar_select %p2071, %s2070, 47
      %s2073 = smul.addr %s2072, 8
      %s2074 = scalar_lea.vmem %s11, %s2073
      // Predicated region
      $region61: #{vae_forward.1} parent=59 // pred_check
        %p2075 = pneg %p261
      $region62: #{vae_forward.1} parent=59 // pred_check_branch
        %2077 = sbr.rel (%p2075) target = $region64
      $region63: #{vae_forward.1} parent=59 // pred_region
        %s2078 = smul.u32 16, %s23
      $region64: #{vae_forward.1} parent=59 // pred_fallthru
        _
      // Predicated region
      $region65: #{vae_forward.1} parent=59 // pred_check
        %p2079 = pneg %p287
      $region66: #{vae_forward.1} parent=59 // pred_check_branch
        %2081 = sbr.rel (%p2079) target = $region68
      $region67: #{vae_forward.1} parent=59 // pred_region
        %s2082 = smul.u32 16, %s23
      $region68: #{vae_forward.1} parent=59 // pred_fallthru
        _
    $region60: #{vae_forward.1} parent=5 // pred_fallthru
      _
    %p2083 = scmp.le.s32.totalorder 2, %s18
    // Predicated region
    $region69: #{vae_forward.1} parent=5 // pred_check
      %p2084 = pneg %p2083
    $region70: #{vae_forward.1} parent=5 // pred_check_branch
      %2086 = sbr.rel (%p2084) target = $region72
    $region71: #{vae_forward.1} parent=5 // pred_region
      %s2087 = ssub.s32 %s18, 2
      // Predicated region
      $region73: #{vae_forward.1} parent=71 // pred_check
        %p2088 = pneg %p267
      $region74: #{vae_forward.1} parent=71 // pred_check_branch
        %2090 = sbr.rel (%p2088) target = $region76
      $region75: #{vae_forward.1} parent=71 // pred_region
        %s2091 = smul.u32 16, %s24
        %p2092 = scmp.lt.s32.totalorder %s2091, 47
        %s2093 = scalar_select %p2092, %s2091, 47
        %s2094 = smul.addr %s2093, 2
        %s2095 = smul.addr %s2094, 8
        %s2096 = scalar_lea.vmem %s10, %s2095
      $region76: #{vae_forward.1} parent=71 // pred_fallthru
        _
      // Predicated region
      $region77: #{vae_forward.1} parent=71 // pred_check
        %p2097 = pneg %p293
      $region78: #{vae_forward.1} parent=71 // pred_check_branch
        %2099 = sbr.rel (%p2097) target = $region80
      $region79: #{vae_forward.1} parent=71 // pred_region
        %s2100 = smul.u32 16, %s24
        %p2101 = scmp.lt.s32.totalorder %s2100, 47
        %s2102 = scalar_select %p2101, %s2100, 47
        %s2103 = smul.addr %s2102, 8
        %s2104 = scalar_lea.vmem %s11, %s2103
      $region80: #{vae_forward.1} parent=71 // pred_fallthru
        _
    $region72: #{vae_forward.1} parent=5 // pred_fallthru
      _
  $region6: #{vae_forward.1} parent=0 // loop_footer
    %s22 = sadd.s32 1, %s18
  $region7: #{vae_forward.1} parent=0 // loop_footer_branch
    %17 = sbr.rel target = $region3
  $region8: #{vae_forward.1} parent=0 // loop_exit
    _

</llo_original>
